<compile_context>
chip_gen: v7x
topology: tpu7x:2x2x1
jax: 0.10.0
libtpu: 0.0.40
codegen_flags: <defaults>
</compile_context>

<pallas_src>
import functools

import jax
import jax.numpy as jnp
from jax.experimental import pallas as pl
from jax.experimental.pallas import tpu as pltpu


def _residual_block_kernel(x_ref, w1_ref, b1_ref, w2_ref, b2_ref, mask_ref,
                           o_ref, *, H, W, negative_slope):
    """One batch sample per grid step.

    x_ref:  (Cp, H*W) f32   input, channels zero-padded to Cp
    w*_ref: (9, Cp, Cp) f32 conv weights (BN folded), tap-major
    b*_ref: (Cp, 1) f32     conv bias (BN folded)
    mask_ref: (9, H*W) f32  border-validity mask per 3x3 tap
    o_ref:  (Cp, H*W) f32   output
    """
    HW = H * W
    x = x_ref[...]                                   # (Cp, HW)

    def conv3x3(inp, w_ref, b_ref):
        acc = jnp.zeros(inp.shape, jnp.float32)
        k = 0
        for dh in (-1, 0, 1):
            for dw in (-1, 0, 1):
                s = dh * W + dw                      # flat source offset
                if s == 0:
                    tap = inp                        # center: mask is all-ones
                else:
                    tap = pltpu.roll(inp, shift=(-s) % HW, axis=1)
                    tap = tap * mask_ref[k:k + 1, :]  # zero out-of-image taps
                acc = acc + jnp.dot(w_ref[k], tap,
                                    preferred_element_type=jnp.float32)
                k += 1
        return acc + b_ref[...]                      # (Cp,1) broadcast over HW

    h1 = conv3x3(x, w1_ref, b1_ref)                  # conv1 + BN1 (folded)
    a1 = jnp.where(h1 > 0, h1, negative_slope * h1)  # LeakyReLU ('lrelu' path)
    h2 = conv3x3(a1, w2_ref, b2_ref)                 # conv2 + BN2 (folded)
    o_ref[...] = x + h2                              # residual connection


def _fold_bn(w, b, gamma, beta, mean, var, eps):
    """Fold inference-mode BatchNorm2d into conv weight/bias."""
    scale = gamma / jnp.sqrt(var + eps)              # (C,)
    w_eff = w * scale[:, None, None, None]           # (C, C, 3, 3)
    b_eff = (b - mean) * scale + beta                # (C,)
    return w_eff, b_eff


def residual_block(x, w1, b1, w2, b2, bn1, bn2, *, negative_slope=0.01,
                   eps=1e-5):
    """Pallas implementation of ResidualBlock.forward (NCHW, float32)."""
    N, C, H, W = x.shape
    HW = H * W
    Cp = ((C + 7) // 8) * 8                          # pad channels to sublane tile

    w1e, b1e = _fold_bn(w1, b1, *bn1, eps)
    w2e, b2e = _fold_bn(w2, b2, *bn2, eps)

    def pack_w(w):                                   # (C,C,3,3) -> (9, Cp, Cp)
        w9 = jnp.transpose(w, (2, 3, 0, 1)).reshape(9, C, C)
        return jnp.pad(w9, ((0, 0), (0, Cp - C), (0, Cp - C)))

    def pack_b(b):                                   # (C,) -> (Cp, 1)
        return jnp.pad(b, (0, Cp - C)).reshape(Cp, 1)

    w1p, w2p = pack_w(w1e), pack_w(w2e)
    b1p, b2p = pack_b(b1e), pack_b(b2e)

    # Lane-dense, channel-padded input view.
    xp = jnp.pad(x.reshape(N, C, HW).astype(jnp.float32),
                 ((0, 0), (0, Cp - C), (0, 0)))

    # Border-validity masks for the 9 taps (shared across channels & batch).
    hh = jnp.arange(H)[:, None]
    ww = jnp.arange(W)[None, :]
    masks = []
    for dh in (-1, 0, 1):
        for dw in (-1, 0, 1):
            valid = ((hh + dh >= 0) & (hh + dh < H) &
                     (ww + dw >= 0) & (ww + dw < W))
            masks.append(valid.reshape(HW))
    masks = jnp.stack(masks).astype(jnp.float32)     # (9, HW)

    kernel = functools.partial(_residual_block_kernel, H=H, W=W,
                               negative_slope=negative_slope)

    y = pl.pallas_call(
        kernel,
        out_shape=jax.ShapeDtypeStruct((N, Cp, HW), jnp.float32),
        grid_spec=pltpu.PrefetchScalarGridSpec(
            num_scalar_prefetch=0,
            grid=(N,),
            in_specs=[
                pl.BlockSpec((pl.Squeezed(), Cp, HW), lambda n: (n, 0, 0)),
                pl.BlockSpec((9, Cp, Cp), lambda n: (0, 0, 0)),
                pl.BlockSpec((Cp, 1), lambda n: (0, 0)),
                pl.BlockSpec((9, Cp, Cp), lambda n: (0, 0, 0)),
                pl.BlockSpec((Cp, 1), lambda n: (0, 0)),
                pl.BlockSpec((9, HW), lambda n: (0, 0)),
            ],
            out_specs=pl.BlockSpec((pl.Squeezed(), Cp, HW),
                                   lambda n: (n, 0, 0)),
        ),
        compiler_params=pltpu.CompilerParams(
            dimension_semantics=("parallel",),
        ),
    )(xp, w1p, b1p, w2p, b2p, masks)

    return y[:, :C, :].reshape(N, C, H, W)


def _reference(x, w1, b1, w2, b2, bn1, bn2, negative_slope=0.01, eps=1e-5):
    """Pure-JAX reference with identical semantics."""
    def conv(v, w, b):
        y = jax.lax.conv_general_dilated(
            v, w, window_strides=(1, 1), padding="SAME",
            dimension_numbers=("NCHW", "OIHW", "NCHW"),
            precision=jax.lax.Precision.HIGHEST)
        return y + b[None, :, None, None]

    def bn(v, gamma, beta, mean, var):
        inv = gamma / jnp.sqrt(var + eps)
        return ((v - mean[None, :, None, None]) * inv[None, :, None, None]
                + beta[None, :, None, None])

    out = bn(conv(x, w1, b1), *bn1)
    out = jnp.where(out > 0, out, negative_slope * out)
    out = bn(conv(out, w2, b2), *bn2)
    return x + out


if __name__ == "__main__":
    key = jax.random.PRNGKey(0)
    ks = jax.random.split(key, 13)
    N, C, H, W = 2, 4, 16, 16

    x = jax.random.normal(ks[0], (N, C, H, W), dtype=jnp.float32)

    fan_in = C * 3 * 3
    w1 = jax.random.normal(ks[1], (C, C, 3, 3), jnp.float32) / jnp.sqrt(fan_in)
    b1 = 0.1 * jax.random.normal(ks[2], (C,), jnp.float32)
    w2 = jax.random.normal(ks[3], (C, C, 3, 3), jnp.float32) / jnp.sqrt(fan_in)
    b2 = 0.1 * jax.random.normal(ks[4], (C,), jnp.float32)

    # BatchNorm params (inference mode: gamma, beta, running_mean, running_var).
    bn1 = (1.0 + 0.1 * jax.random.normal(ks[5], (C,), jnp.float32),
           0.1 * jax.random.normal(ks[6], (C,), jnp.float32),
           0.1 * jax.random.normal(ks[7], (C,), jnp.float32),
           jnp.abs(1.0 + 0.1 * jax.random.normal(ks[8], (C,), jnp.float32)))
    bn2 = (1.0 + 0.1 * jax.random.normal(ks[9], (C,), jnp.float32),
           0.1 * jax.random.normal(ks[10], (C,), jnp.float32),
           0.1 * jax.random.normal(ks[11], (C,), jnp.float32),
           jnp.abs(1.0 + 0.1 * jax.random.normal(ks[12], (C,), jnp.float32)))

    y = residual_block(x, w1, b1, w2, b2, bn1, bn2)
    jax.block_until_ready(y)

    y_ref = _reference(x, w1, b1, w2, b2, bn1, bn2)
    assert y.shape == x.shape
    max_err = float(jnp.max(jnp.abs(y - y_ref)))
    assert jnp.allclose(y, y_ref, atol=1e-3, rtol=1e-3), max_err

    print("KERNEL_OK")
</pallas_src>

<mosaic_0001>
module attributes {stable_mosaic.version = 11 : i64} {
  func.func @_residual_block_kernel(%arg0: i32, %arg1: memref<1x8x256xf32, #tpu.memory_space<vmem>>, %arg2: memref<9x8x8xf32, #tpu.memory_space<vmem>>, %arg3: memref<8x1xf32, #tpu.memory_space<vmem>>, %arg4: memref<9x8x8xf32, #tpu.memory_space<vmem>>, %arg5: memref<8x1xf32, #tpu.memory_space<vmem>>, %arg6: memref<9x256xf32, #tpu.memory_space<vmem>>, %arg7: memref<1x8x256xf32, #tpu.memory_space<vmem>>) attributes {dimension_semantics = [#tpu.dimension_semantics<parallel>], iteration_bounds = array<i64: 2>, scalar_prefetch = 0 : i64, scratch_operands = 0 : i64, tpu.core_type = #tpu.core_type<tc>, window_params = [{transform_indices = @transform_0, window_bounds = array<i64: 1, 8, 256>}, {pipeline_mode = #tpu.pipeline_mode<synchronous>, transform_indices = @transform_1, window_bounds = array<i64: 9, 8, 8>}, {pipeline_mode = #tpu.pipeline_mode<synchronous>, transform_indices = @transform_2, window_bounds = array<i64: 8, 1>}, {pipeline_mode = #tpu.pipeline_mode<synchronous>, transform_indices = @transform_3, window_bounds = array<i64: 9, 8, 8>}, {pipeline_mode = #tpu.pipeline_mode<synchronous>, transform_indices = @transform_4, window_bounds = array<i64: 8, 1>}, {pipeline_mode = #tpu.pipeline_mode<synchronous>, transform_indices = @transform_5, window_bounds = array<i64: 9, 256>}, {transform_indices = @transform_6, window_bounds = array<i64: 1, 8, 256>}]} {
    %c0 = arith.constant 0 : index
    %c0_0 = arith.constant 0 : index
    %c0_1 = arith.constant 0 : index
    %0 = vector.load %arg1[%c0, %c0_0, %c0_1] : memref<1x8x256xf32, #tpu.memory_space<vmem>>, vector<1x8x256xf32>
    %1 = vector.shape_cast %0 : vector<1x8x256xf32> to vector<8x256xf32>
    %cst = arith.constant 0.000000e+00 : f32
    %2 = vector.broadcast %cst : f32 to vector<8x256xf32>
    %c17_i32 = arith.constant 17 : i32
    %3 = tpu.dynamic_rotate %1 by %c17_i32 dim 1 : vector<8x256xf32>, i32 -> vector<8x256xf32>
    %c0_2 = arith.constant 0 : index
    %c0_3 = arith.constant 0 : index
    %4 = vector.load %arg6[%c0_2, %c0_3] : memref<9x256xf32, #tpu.memory_space<vmem>>, vector<1x256xf32>
    %5 = vector.broadcast %4 : vector<1x256xf32> to vector<8x256xf32>
    %6 = arith.mulf %3, %5 : vector<8x256xf32>
    %c0_4 = arith.constant 0 : index
    %c0_5 = arith.constant 0 : index
    %c0_6 = arith.constant 0 : index
    %7 = vector.load %arg2[%c0_4, %c0_5, %c0_6] : memref<9x8x8xf32, #tpu.memory_space<vmem>>, vector<1x8x8xf32>
    %8 = vector.shape_cast %7 : vector<1x8x8xf32> to vector<8x8xf32>
    %cst_7 = arith.constant dense<0.000000e+00> : vector<8x256xf32>
    %9 = tpu.matmul %8, %6, %cst_7 {dimension_numbers = #tpu.dot_dimension_numbers<[1], [0], [0], [1], [0, 0, 1, 1], [], []>} : vector<8x8xf32>, vector<8x256xf32>, vector<8x256xf32> -> vector<8x256xf32>
    %10 = arith.addf %2, %9 : vector<8x256xf32>
    %c16_i32 = arith.constant 16 : i32
    %11 = tpu.dynamic_rotate %1 by %c16_i32 dim 1 : vector<8x256xf32>, i32 -> vector<8x256xf32>
    %c1 = arith.constant 1 : index
    %c0_8 = arith.constant 0 : index
    %12 = vector.load %arg6[%c1, %c0_8] : memref<9x256xf32, #tpu.memory_space<vmem>>, vector<1x256xf32>
    %13 = vector.broadcast %12 : vector<1x256xf32> to vector<8x256xf32>
    %14 = arith.mulf %11, %13 : vector<8x256xf32>
    %c1_9 = arith.constant 1 : index
    %c0_10 = arith.constant 0 : index
    %c0_11 = arith.constant 0 : index
    %15 = vector.load %arg2[%c1_9, %c0_10, %c0_11] : memref<9x8x8xf32, #tpu.memory_space<vmem>>, vector<1x8x8xf32>
    %16 = vector.shape_cast %15 : vector<1x8x8xf32> to vector<8x8xf32>
    %cst_12 = arith.constant dense<0.000000e+00> : vector<8x256xf32>
    %17 = tpu.matmul %16, %14, %cst_12 {dimension_numbers = #tpu.dot_dimension_numbers<[1], [0], [0], [1], [0, 0, 1, 1], [], []>} : vector<8x8xf32>, vector<8x256xf32>, vector<8x256xf32> -> vector<8x256xf32>
    %18 = arith.addf %10, %17 : vector<8x256xf32>
    %c15_i32 = arith.constant 15 : i32
    %19 = tpu.dynamic_rotate %1 by %c15_i32 dim 1 : vector<8x256xf32>, i32 -> vector<8x256xf32>
    %c2 = arith.constant 2 : index
    %c0_13 = arith.constant 0 : index
    %20 = vector.load %arg6[%c2, %c0_13] : memref<9x256xf32, #tpu.memory_space<vmem>>, vector<1x256xf32>
    %21 = vector.broadcast %20 : vector<1x256xf32> to vector<8x256xf32>
    %22 = arith.mulf %19, %21 : vector<8x256xf32>
    %c2_14 = arith.constant 2 : index
    %c0_15 = arith.constant 0 : index
    %c0_16 = arith.constant 0 : index
    %23 = vector.load %arg2[%c2_14, %c0_15, %c0_16] : memref<9x8x8xf32, #tpu.memory_space<vmem>>, vector<1x8x8xf32>
    %24 = vector.shape_cast %23 : vector<1x8x8xf32> to vector<8x8xf32>
    %cst_17 = arith.constant dense<0.000000e+00> : vector<8x256xf32>
    %25 = tpu.matmul %24, %22, %cst_17 {dimension_numbers = #tpu.dot_dimension_numbers<[1], [0], [0], [1], [0, 0, 1, 1], [], []>} : vector<8x8xf32>, vector<8x256xf32>, vector<8x256xf32> -> vector<8x256xf32>
    %26 = arith.addf %18, %25 : vector<8x256xf32>
    %c1_i32 = arith.constant 1 : i32
    %27 = tpu.dynamic_rotate %1 by %c1_i32 dim 1 : vector<8x256xf32>, i32 -> vector<8x256xf32>
    %c3 = arith.constant 3 : index
    %c0_18 = arith.constant 0 : index
    %28 = vector.load %arg6[%c3, %c0_18] : memref<9x256xf32, #tpu.memory_space<vmem>>, vector<1x256xf32>
    %29 = vector.broadcast %28 : vector<1x256xf32> to vector<8x256xf32>
    %30 = arith.mulf %27, %29 : vector<8x256xf32>
    %c3_19 = arith.constant 3 : index
    %c0_20 = arith.constant 0 : index
    %c0_21 = arith.constant 0 : index
    %31 = vector.load %arg2[%c3_19, %c0_20, %c0_21] : memref<9x8x8xf32, #tpu.memory_space<vmem>>, vector<1x8x8xf32>
    %32 = vector.shape_cast %31 : vector<1x8x8xf32> to vector<8x8xf32>
    %cst_22 = arith.constant dense<0.000000e+00> : vector<8x256xf32>
    %33 = tpu.matmul %32, %30, %cst_22 {dimension_numbers = #tpu.dot_dimension_numbers<[1], [0], [0], [1], [0, 0, 1, 1], [], []>} : vector<8x8xf32>, vector<8x256xf32>, vector<8x256xf32> -> vector<8x256xf32>
    %34 = arith.addf %26, %33 : vector<8x256xf32>
    %c4 = arith.constant 4 : index
    %c0_23 = arith.constant 0 : index
    %c0_24 = arith.constant 0 : index
    %35 = vector.load %arg2[%c4, %c0_23, %c0_24] : memref<9x8x8xf32, #tpu.memory_space<vmem>>, vector<1x8x8xf32>
    %36 = vector.shape_cast %35 : vector<1x8x8xf32> to vector<8x8xf32>
    %cst_25 = arith.constant dense<0.000000e+00> : vector<8x256xf32>
    %37 = tpu.matmul %36, %1, %cst_25 {dimension_numbers = #tpu.dot_dimension_numbers<[1], [0], [0], [1], [0, 0, 1, 1], [], []>} : vector<8x8xf32>, vector<8x256xf32>, vector<8x256xf32> -> vector<8x256xf32>
    %38 = arith.addf %34, %37 : vector<8x256xf32>
    %c255_i32 = arith.constant 255 : i32
    %39 = tpu.dynamic_rotate %1 by %c255_i32 dim 1 : vector<8x256xf32>, i32 -> vector<8x256xf32>
    %c5 = arith.constant 5 : index
    %c0_26 = arith.constant 0 : index
    %40 = vector.load %arg6[%c5, %c0_26] : memref<9x256xf32, #tpu.memory_space<vmem>>, vector<1x256xf32>
    %41 = vector.broadcast %40 : vector<1x256xf32> to vector<8x256xf32>
    %42 = arith.mulf %39, %41 : vector<8x256xf32>
    %c5_27 = arith.constant 5 : index
    %c0_28 = arith.constant 0 : index
    %c0_29 = arith.constant 0 : index
    %43 = vector.load %arg2[%c5_27, %c0_28, %c0_29] : memref<9x8x8xf32, #tpu.memory_space<vmem>>, vector<1x8x8xf32>
    %44 = vector.shape_cast %43 : vector<1x8x8xf32> to vector<8x8xf32>
    %cst_30 = arith.constant dense<0.000000e+00> : vector<8x256xf32>
    %45 = tpu.matmul %44, %42, %cst_30 {dimension_numbers = #tpu.dot_dimension_numbers<[1], [0], [0], [1], [0, 0, 1, 1], [], []>} : vector<8x8xf32>, vector<8x256xf32>, vector<8x256xf32> -> vector<8x256xf32>
    %46 = arith.addf %38, %45 : vector<8x256xf32>
    %c241_i32 = arith.constant 241 : i32
    %47 = tpu.dynamic_rotate %1 by %c241_i32 dim 1 : vector<8x256xf32>, i32 -> vector<8x256xf32>
    %c6 = arith.constant 6 : index
    %c0_31 = arith.constant 0 : index
    %48 = vector.load %arg6[%c6, %c0_31] : memref<9x256xf32, #tpu.memory_space<vmem>>, vector<1x256xf32>
    %49 = vector.broadcast %48 : vector<1x256xf32> to vector<8x256xf32>
    %50 = arith.mulf %47, %49 : vector<8x256xf32>
    %c6_32 = arith.constant 6 : index
    %c0_33 = arith.constant 0 : index
    %c0_34 = arith.constant 0 : index
    %51 = vector.load %arg2[%c6_32, %c0_33, %c0_34] : memref<9x8x8xf32, #tpu.memory_space<vmem>>, vector<1x8x8xf32>
    %52 = vector.shape_cast %51 : vector<1x8x8xf32> to vector<8x8xf32>
    %cst_35 = arith.constant dense<0.000000e+00> : vector<8x256xf32>
    %53 = tpu.matmul %52, %50, %cst_35 {dimension_numbers = #tpu.dot_dimension_numbers<[1], [0], [0], [1], [0, 0, 1, 1], [], []>} : vector<8x8xf32>, vector<8x256xf32>, vector<8x256xf32> -> vector<8x256xf32>
    %54 = arith.addf %46, %53 : vector<8x256xf32>
    %c240_i32 = arith.constant 240 : i32
    %55 = tpu.dynamic_rotate %1 by %c240_i32 dim 1 : vector<8x256xf32>, i32 -> vector<8x256xf32>
    %c7 = arith.constant 7 : index
    %c0_36 = arith.constant 0 : index
    %56 = vector.load %arg6[%c7, %c0_36] : memref<9x256xf32, #tpu.memory_space<vmem>>, vector<1x256xf32>
    %57 = vector.broadcast %56 : vector<1x256xf32> to vector<8x256xf32>
    %58 = arith.mulf %55, %57 : vector<8x256xf32>
    %c7_37 = arith.constant 7 : index
    %c0_38 = arith.constant 0 : index
    %c0_39 = arith.constant 0 : index
    %59 = vector.load %arg2[%c7_37, %c0_38, %c0_39] : memref<9x8x8xf32, #tpu.memory_space<vmem>>, vector<1x8x8xf32>
    %60 = vector.shape_cast %59 : vector<1x8x8xf32> to vector<8x8xf32>
    %cst_40 = arith.constant dense<0.000000e+00> : vector<8x256xf32>
    %61 = tpu.matmul %60, %58, %cst_40 {dimension_numbers = #tpu.dot_dimension_numbers<[1], [0], [0], [1], [0, 0, 1, 1], [], []>} : vector<8x8xf32>, vector<8x256xf32>, vector<8x256xf32> -> vector<8x256xf32>
    %62 = arith.addf %54, %61 : vector<8x256xf32>
    %c239_i32 = arith.constant 239 : i32
    %63 = tpu.dynamic_rotate %1 by %c239_i32 dim 1 : vector<8x256xf32>, i32 -> vector<8x256xf32>
    %c8 = arith.constant 8 : index
    %c0_41 = arith.constant 0 : index
    %64 = vector.load %arg6[%c8, %c0_41] : memref<9x256xf32, #tpu.memory_space<vmem>>, vector<1x256xf32>
    %65 = vector.broadcast %64 : vector<1x256xf32> to vector<8x256xf32>
    %66 = arith.mulf %63, %65 : vector<8x256xf32>
    %c8_42 = arith.constant 8 : index
    %c0_43 = arith.constant 0 : index
    %c0_44 = arith.constant 0 : index
    %67 = vector.load %arg2[%c8_42, %c0_43, %c0_44] : memref<9x8x8xf32, #tpu.memory_space<vmem>>, vector<1x8x8xf32>
    %68 = vector.shape_cast %67 : vector<1x8x8xf32> to vector<8x8xf32>
    %cst_45 = arith.constant dense<0.000000e+00> : vector<8x256xf32>
    %69 = tpu.matmul %68, %66, %cst_45 {dimension_numbers = #tpu.dot_dimension_numbers<[1], [0], [0], [1], [0, 0, 1, 1], [], []>} : vector<8x8xf32>, vector<8x256xf32>, vector<8x256xf32> -> vector<8x256xf32>
    %70 = arith.addf %62, %69 : vector<8x256xf32>
    %c0_46 = arith.constant 0 : index
    %c0_47 = arith.constant 0 : index
    %71 = vector.load %arg3[%c0_46, %c0_47] : memref<8x1xf32, #tpu.memory_space<vmem>>, vector<8x1xf32>
    %72 = vector.broadcast %71 : vector<8x1xf32> to vector<8x256xf32>
    %73 = arith.addf %70, %72 : vector<8x256xf32>
    %cst_48 = arith.constant 0.000000e+00 : f32
    %74 = vector.broadcast %cst_48 : f32 to vector<8x256xf32>
    %75 = arith.cmpf ogt, %73, %74 : vector<8x256xf32>
    %cst_49 = arith.constant 0.00999999977 : f32
    %76 = vector.broadcast %cst_49 : f32 to vector<8x256xf32>
    %77 = arith.mulf %76, %73 : vector<8x256xf32>
    %78 = arith.select %75, %73, %77 : vector<8x256xi1>, vector<8x256xf32>
    %cst_50 = arith.constant 0.000000e+00 : f32
    %79 = vector.broadcast %cst_50 : f32 to vector<8x256xf32>
    %c17_i32_51 = arith.constant 17 : i32
    %80 = tpu.dynamic_rotate %78 by %c17_i32_51 dim 1 : vector<8x256xf32>, i32 -> vector<8x256xf32>
    %c0_52 = arith.constant 0 : index
    %c0_53 = arith.constant 0 : index
    %81 = vector.load %arg6[%c0_52, %c0_53] : memref<9x256xf32, #tpu.memory_space<vmem>>, vector<1x256xf32>
    %82 = vector.broadcast %81 : vector<1x256xf32> to vector<8x256xf32>
    %83 = arith.mulf %80, %82 : vector<8x256xf32>
    %c0_54 = arith.constant 0 : index
    %c0_55 = arith.constant 0 : index
    %c0_56 = arith.constant 0 : index
    %84 = vector.load %arg4[%c0_54, %c0_55, %c0_56] : memref<9x8x8xf32, #tpu.memory_space<vmem>>, vector<1x8x8xf32>
    %85 = vector.shape_cast %84 : vector<1x8x8xf32> to vector<8x8xf32>
    %cst_57 = arith.constant dense<0.000000e+00> : vector<8x256xf32>
    %86 = tpu.matmul %85, %83, %cst_57 {dimension_numbers = #tpu.dot_dimension_numbers<[1], [0], [0], [1], [0, 0, 1, 1], [], []>} : vector<8x8xf32>, vector<8x256xf32>, vector<8x256xf32> -> vector<8x256xf32>
    %87 = arith.addf %79, %86 : vector<8x256xf32>
    %c16_i32_58 = arith.constant 16 : i32
    %88 = tpu.dynamic_rotate %78 by %c16_i32_58 dim 1 : vector<8x256xf32>, i32 -> vector<8x256xf32>
    %c1_59 = arith.constant 1 : index
    %c0_60 = arith.constant 0 : index
    %89 = vector.load %arg6[%c1_59, %c0_60] : memref<9x256xf32, #tpu.memory_space<vmem>>, vector<1x256xf32>
    %90 = vector.broadcast %89 : vector<1x256xf32> to vector<8x256xf32>
    %91 = arith.mulf %88, %90 : vector<8x256xf32>
    %c1_61 = arith.constant 1 : index
    %c0_62 = arith.constant 0 : index
    %c0_63 = arith.constant 0 : index
    %92 = vector.load %arg4[%c1_61, %c0_62, %c0_63] : memref<9x8x8xf32, #tpu.memory_space<vmem>>, vector<1x8x8xf32>
    %93 = vector.shape_cast %92 : vector<1x8x8xf32> to vector<8x8xf32>
    %cst_64 = arith.constant dense<0.000000e+00> : vector<8x256xf32>
    %94 = tpu.matmul %93, %91, %cst_64 {dimension_numbers = #tpu.dot_dimension_numbers<[1], [0], [0], [1], [0, 0, 1, 1], [], []>} : vector<8x8xf32>, vector<8x256xf32>, vector<8x256xf32> -> vector<8x256xf32>
    %95 = arith.addf %87, %94 : vector<8x256xf32>
    %c15_i32_65 = arith.constant 15 : i32
    %96 = tpu.dynamic_rotate %78 by %c15_i32_65 dim 1 : vector<8x256xf32>, i32 -> vector<8x256xf32>
    %c2_66 = arith.constant 2 : index
    %c0_67 = arith.constant 0 : index
    %97 = vector.load %arg6[%c2_66, %c0_67] : memref<9x256xf32, #tpu.memory_space<vmem>>, vector<1x256xf32>
    %98 = vector.broadcast %97 : vector<1x256xf32> to vector<8x256xf32>
    %99 = arith.mulf %96, %98 : vector<8x256xf32>
    %c2_68 = arith.constant 2 : index
    %c0_69 = arith.constant 0 : index
    %c0_70 = arith.constant 0 : index
    %100 = vector.load %arg4[%c2_68, %c0_69, %c0_70] : memref<9x8x8xf32, #tpu.memory_space<vmem>>, vector<1x8x8xf32>
    %101 = vector.shape_cast %100 : vector<1x8x8xf32> to vector<8x8xf32>
    %cst_71 = arith.constant dense<0.000000e+00> : vector<8x256xf32>
    %102 = tpu.matmul %101, %99, %cst_71 {dimension_numbers = #tpu.dot_dimension_numbers<[1], [0], [0], [1], [0, 0, 1, 1], [], []>} : vector<8x8xf32>, vector<8x256xf32>, vector<8x256xf32> -> vector<8x256xf32>
    %103 = arith.addf %95, %102 : vector<8x256xf32>
    %c1_i32_72 = arith.constant 1 : i32
    %104 = tpu.dynamic_rotate %78 by %c1_i32_72 dim 1 : vector<8x256xf32>, i32 -> vector<8x256xf32>
    %c3_73 = arith.constant 3 : index
    %c0_74 = arith.constant 0 : index
    %105 = vector.load %arg6[%c3_73, %c0_74] : memref<9x256xf32, #tpu.memory_space<vmem>>, vector<1x256xf32>
    %106 = vector.broadcast %105 : vector<1x256xf32> to vector<8x256xf32>
    %107 = arith.mulf %104, %106 : vector<8x256xf32>
    %c3_75 = arith.constant 3 : index
    %c0_76 = arith.constant 0 : index
    %c0_77 = arith.constant 0 : index
    %108 = vector.load %arg4[%c3_75, %c0_76, %c0_77] : memref<9x8x8xf32, #tpu.memory_space<vmem>>, vector<1x8x8xf32>
    %109 = vector.shape_cast %108 : vector<1x8x8xf32> to vector<8x8xf32>
    %cst_78 = arith.constant dense<0.000000e+00> : vector<8x256xf32>
    %110 = tpu.matmul %109, %107, %cst_78 {dimension_numbers = #tpu.dot_dimension_numbers<[1], [0], [0], [1], [0, 0, 1, 1], [], []>} : vector<8x8xf32>, vector<8x256xf32>, vector<8x256xf32> -> vector<8x256xf32>
    %111 = arith.addf %103, %110 : vector<8x256xf32>
    %c4_79 = arith.constant 4 : index
    %c0_80 = arith.constant 0 : index
    %c0_81 = arith.constant 0 : index
    %112 = vector.load %arg4[%c4_79, %c0_80, %c0_81] : memref<9x8x8xf32, #tpu.memory_space<vmem>>, vector<1x8x8xf32>
    %113 = vector.shape_cast %112 : vector<1x8x8xf32> to vector<8x8xf32>
    %cst_82 = arith.constant dense<0.000000e+00> : vector<8x256xf32>
    %114 = tpu.matmul %113, %78, %cst_82 {dimension_numbers = #tpu.dot_dimension_numbers<[1], [0], [0], [1], [0, 0, 1, 1], [], []>} : vector<8x8xf32>, vector<8x256xf32>, vector<8x256xf32> -> vector<8x256xf32>
    %115 = arith.addf %111, %114 : vector<8x256xf32>
    %c255_i32_83 = arith.constant 255 : i32
    %116 = tpu.dynamic_rotate %78 by %c255_i32_83 dim 1 : vector<8x256xf32>, i32 -> vector<8x256xf32>
    %c5_84 = arith.constant 5 : index
    %c0_85 = arith.constant 0 : index
    %117 = vector.load %arg6[%c5_84, %c0_85] : memref<9x256xf32, #tpu.memory_space<vmem>>, vector<1x256xf32>
    %118 = vector.broadcast %117 : vector<1x256xf32> to vector<8x256xf32>
    %119 = arith.mulf %116, %118 : vector<8x256xf32>
    %c5_86 = arith.constant 5 : index
    %c0_87 = arith.constant 0 : index
    %c0_88 = arith.constant 0 : index
    %120 = vector.load %arg4[%c5_86, %c0_87, %c0_88] : memref<9x8x8xf32, #tpu.memory_space<vmem>>, vector<1x8x8xf32>
    %121 = vector.shape_cast %120 : vector<1x8x8xf32> to vector<8x8xf32>
    %cst_89 = arith.constant dense<0.000000e+00> : vector<8x256xf32>
    %122 = tpu.matmul %121, %119, %cst_89 {dimension_numbers = #tpu.dot_dimension_numbers<[1], [0], [0], [1], [0, 0, 1, 1], [], []>} : vector<8x8xf32>, vector<8x256xf32>, vector<8x256xf32> -> vector<8x256xf32>
    %123 = arith.addf %115, %122 : vector<8x256xf32>
    %c241_i32_90 = arith.constant 241 : i32
    %124 = tpu.dynamic_rotate %78 by %c241_i32_90 dim 1 : vector<8x256xf32>, i32 -> vector<8x256xf32>
    %c6_91 = arith.constant 6 : index
    %c0_92 = arith.constant 0 : index
    %125 = vector.load %arg6[%c6_91, %c0_92] : memref<9x256xf32, #tpu.memory_space<vmem>>, vector<1x256xf32>
    %126 = vector.broadcast %125 : vector<1x256xf32> to vector<8x256xf32>
    %127 = arith.mulf %124, %126 : vector<8x256xf32>
    %c6_93 = arith.constant 6 : index
    %c0_94 = arith.constant 0 : index
    %c0_95 = arith.constant 0 : index
    %128 = vector.load %arg4[%c6_93, %c0_94, %c0_95] : memref<9x8x8xf32, #tpu.memory_space<vmem>>, vector<1x8x8xf32>
    %129 = vector.shape_cast %128 : vector<1x8x8xf32> to vector<8x8xf32>
    %cst_96 = arith.constant dense<0.000000e+00> : vector<8x256xf32>
    %130 = tpu.matmul %129, %127, %cst_96 {dimension_numbers = #tpu.dot_dimension_numbers<[1], [0], [0], [1], [0, 0, 1, 1], [], []>} : vector<8x8xf32>, vector<8x256xf32>, vector<8x256xf32> -> vector<8x256xf32>
    %131 = arith.addf %123, %130 : vector<8x256xf32>
    %c240_i32_97 = arith.constant 240 : i32
    %132 = tpu.dynamic_rotate %78 by %c240_i32_97 dim 1 : vector<8x256xf32>, i32 -> vector<8x256xf32>
    %c7_98 = arith.constant 7 : index
    %c0_99 = arith.constant 0 : index
    %133 = vector.load %arg6[%c7_98, %c0_99] : memref<9x256xf32, #tpu.memory_space<vmem>>, vector<1x256xf32>
    %134 = vector.broadcast %133 : vector<1x256xf32> to vector<8x256xf32>
    %135 = arith.mulf %132, %134 : vector<8x256xf32>
    %c7_100 = arith.constant 7 : index
    %c0_101 = arith.constant 0 : index
    %c0_102 = arith.constant 0 : index
    %136 = vector.load %arg4[%c7_100, %c0_101, %c0_102] : memref<9x8x8xf32, #tpu.memory_space<vmem>>, vector<1x8x8xf32>
    %137 = vector.shape_cast %136 : vector<1x8x8xf32> to vector<8x8xf32>
    %cst_103 = arith.constant dense<0.000000e+00> : vector<8x256xf32>
    %138 = tpu.matmul %137, %135, %cst_103 {dimension_numbers = #tpu.dot_dimension_numbers<[1], [0], [0], [1], [0, 0, 1, 1], [], []>} : vector<8x8xf32>, vector<8x256xf32>, vector<8x256xf32> -> vector<8x256xf32>
    %139 = arith.addf %131, %138 : vector<8x256xf32>
    %c239_i32_104 = arith.constant 239 : i32
    %140 = tpu.dynamic_rotate %78 by %c239_i32_104 dim 1 : vector<8x256xf32>, i32 -> vector<8x256xf32>
    %c8_105 = arith.constant 8 : index
    %c0_106 = arith.constant 0 : index
    %141 = vector.load %arg6[%c8_105, %c0_106] : memref<9x256xf32, #tpu.memory_space<vmem>>, vector<1x256xf32>
    %142 = vector.broadcast %141 : vector<1x256xf32> to vector<8x256xf32>
    %143 = arith.mulf %140, %142 : vector<8x256xf32>
    %c8_107 = arith.constant 8 : index
    %c0_108 = arith.constant 0 : index
    %c0_109 = arith.constant 0 : index
    %144 = vector.load %arg4[%c8_107, %c0_108, %c0_109] : memref<9x8x8xf32, #tpu.memory_space<vmem>>, vector<1x8x8xf32>
    %145 = vector.shape_cast %144 : vector<1x8x8xf32> to vector<8x8xf32>
    %cst_110 = arith.constant dense<0.000000e+00> : vector<8x256xf32>
    %146 = tpu.matmul %145, %143, %cst_110 {dimension_numbers = #tpu.dot_dimension_numbers<[1], [0], [0], [1], [0, 0, 1, 1], [], []>} : vector<8x8xf32>, vector<8x256xf32>, vector<8x256xf32> -> vector<8x256xf32>
    %147 = arith.addf %139, %146 : vector<8x256xf32>
    %c0_111 = arith.constant 0 : index
    %c0_112 = arith.constant 0 : index
    %148 = vector.load %arg5[%c0_111, %c0_112] : memref<8x1xf32, #tpu.memory_space<vmem>>, vector<8x1xf32>
    %149 = vector.broadcast %148 : vector<8x1xf32> to vector<8x256xf32>
    %150 = arith.addf %147, %149 : vector<8x256xf32>
    %151 = arith.addf %1, %150 : vector<8x256xf32>
    %c0_113 = arith.constant 0 : index
    %c0_114 = arith.constant 0 : index
    %c0_115 = arith.constant 0 : index
    %152 = vector.load %arg7[%c0_113, %c0_114, %c0_115] : memref<1x8x256xf32, #tpu.memory_space<vmem>>, vector<1x8x256xf32>
    %153 = vector.shape_cast %152 : vector<1x8x256xf32> to vector<8x256xf32>
    %154 = vector.shape_cast %151 : vector<8x256xf32> to vector<1x8x256xf32>
    tpu.vector_store %arg7[%c0_113, %c0_114, %c0_115], %154 {strides = array<i32>} : memref<1x8x256xf32, #tpu.memory_space<vmem>>, vector<1x8x256xf32>,
    return
  }
  func.func @transform_0(%arg0: i32) -> (i32, i32, i32) {
    %c0_i32 = arith.constant 0 : i32
    %c0_i32_0 = arith.constant 0 : i32
    %c0_i32_1 = arith.constant 0 : i32
    return %arg0, %c0_i32, %c0_i32_0 : i32, i32, i32
  }
  func.func @transform_1(%arg0: i32) -> (i32, i32, i32) {
    %c0_i32 = arith.constant 0 : i32
    %c0_i32_0 = arith.constant 0 : i32
    %c0_i32_1 = arith.constant 0 : i32
    %c0_i32_2 = arith.constant 0 : i32
    return %c0_i32, %c0_i32_0, %c0_i32_1 : i32, i32, i32
  }
  func.func @transform_2(%arg0: i32) -> (i32, i32) {
    %c0_i32 = arith.constant 0 : i32
    %c0_i32_0 = arith.constant 0 : i32
    %c0_i32_1 = arith.constant 0 : i32
    return %c0_i32, %c0_i32_0 : i32, i32
  }
  func.func @transform_3(%arg0: i32) -> (i32, i32, i32) {
    %c0_i32 = arith.constant 0 : i32
    %c0_i32_0 = arith.constant 0 : i32
    %c0_i32_1 = arith.constant 0 : i32
    %c0_i32_2 = arith.constant 0 : i32
    return %c0_i32, %c0_i32_0, %c0_i32_1 : i32, i32, i32
  }
  func.func @transform_4(%arg0: i32) -> (i32, i32) {
    %c0_i32 = arith.constant 0 : i32
    %c0_i32_0 = arith.constant 0 : i32
    %c0_i32_1 = arith.constant 0 : i32
    return %c0_i32, %c0_i32_0 : i32, i32
  }
  func.func @transform_5(%arg0: i32) -> (i32, i32) {
    %c0_i32 = arith.constant 0 : i32
    %c0_i32_0 = arith.constant 0 : i32
    %c0_i32_1 = arith.constant 0 : i32
    return %c0_i32, %c0_i32_0 : i32, i32
  }
  func.func @transform_6(%arg0: i32) -> (i32, i32, i32) {
    %c0_i32 = arith.constant 0 : i32
    %c0_i32_0 = arith.constant 0 : i32
    %c0_i32_1 = arith.constant 0 : i32
    return %arg0, %c0_i32, %c0_i32_0 : i32, i32, i32
  }
}

</mosaic_0001>

<llo_original>
// kernel: tpu_custom_call.1
$region0: #{tpu_custom_call.1}
  #allocation0 [shape = 'u32[]', space=smem, size = 0x4, offset = 0x4, fixed_abs, tag = 'smem constant byte address 0x4 - core index']
  #allocation1 [shape = 'u32[144,128]{1,0:T(1,128)}', space=vmem, size = 0x12000, scoped, tag = 'internal scratch']
  %s0 = inlined_call_operand.vmem [shape: f32[2,8,256], index: 0, kind: input, shape index: {}]
  %s1 = inlined_call_operand.vmem [shape: f32[9,8,8], index: 1, kind: input, shape index: {}]
  %s2 = inlined_call_operand.vmem [shape: f32[8,1], index: 2, kind: input, shape index: {}]
  %s3 = inlined_call_operand.vmem [shape: f32[9,8,8], index: 3, kind: input, shape index: {}]
  %s4 = inlined_call_operand.vmem [shape: f32[8,1], index: 4, kind: input, shape index: {}]
  %s5 = inlined_call_operand.vmem [shape: f32[9,256], index: 5, kind: input, shape index: {}]
  %s6 = inlined_call_operand.hbm [shape: f32[2,8,256], index: 6, kind: output, shape index: {}]
  %s7 = sld [smem:[#allocation0]]
  $region57: #{tpu_custom_call.1} parent=0
    _
  %s9 = ssub.s32 1, %s7
  %s10 = scalar_select 0, %s9, %s7
  $region1: #{tpu_custom_call.1} parent=0
    #allocation2 [shape = 'u8[16384]{0}', space=vmem, size = 0x4000, scoped, tag = 'output window, operand 0']
    #allocation3 [shape = 's32[2]{0}', space=sflag, size = 0x8, scoped, tag = 'scoped memory for tpu_custom_call.1']
    %11 = vsyncpa [#allocation3], 0
    %s12 = scalar_lea.sflag [#allocation3], 1
    %13 = vsyncpa %s12, 0
    loop: start=0, step=1, limit=4
    $region2: #{tpu_custom_call.1} parent=1 // loop_pre_header
      _
    $region3: #{tpu_custom_call.1} parent=1 // loop_header
      %s15 = sphi 0, %s19
      %p16 = scmp.ge.s32.totalorder %s15, 4
      %s25 = sphi 0, %s27
      %s28 = sphi 0, %s25
      %s29 = sphi 0, %s28
      %s45 = sphi 0, %s29
      %s49 = sphi 0, %s49
      %s51 = sphi 0, %s49
      %s52 = sphi 0, %s51
      %s66 = sphi 0, %s52
      %s70 = sphi 0, %s70
      %s72 = sphi 0, %s70
      %s73 = sphi 0, %s72
      %s87 = sphi 0, %s73
      %s91 = sphi 0, %s91
      %s93 = sphi 0, %s91
      %s94 = sphi 0, %s93
      %s108 = sphi 0, %s94
      %s112 = sphi 0, %s112
      %s114 = sphi 0, %s112
      %s115 = sphi 0, %s114
      %s129 = sphi 0, %s115
      %s133 = sphi 0, %s133
      %s135 = sphi 0, %s133
      %s136 = sphi 0, %s135
      %s150 = sphi 0, %s136
      %s156 = sphi 0, %s158
      %s159 = sphi 0, %s156
      %s160 = sphi 0, %s159
      %s176 = sphi 0, %s160
    $region4: #{tpu_custom_call.1} parent=1 // loop_header_branch
      %18 = sbr.rel (%p16) target = $region8
    $region5: #{tpu_custom_call.1} parent=1 // loop_body
      %s20 = ssub.s32 %s15, 1
      %s21 = ssub.s32 %s15, 2
      %s22 = sadd.s32 %s15, 1
      %s23 = ssub.s32 %s15, %s22
      %p24 = scmp.eq.s32.totalorder %s23, 0
      %s26 = sadd.s32 %s25, 1
      %s27 = scalar_select %p24, %s25, %s26
      %p30 = pneg %p24
      %p31 = scmp.eq.s32.totalorder %s15, 1
      %p32 = por %p30, %p31
      %p33 = scmp.ne.s32.totalorder %s25, %s28
      %p34 = scmp.eq.s32.totalorder %s15, 0
      %p35 = por %p33, %p34
      %p36 = scmp.ne.s32.totalorder %s25, %s28
      %p37 = scmp.eq.s32.totalorder %s20, 1
      %p38 = por %p36, %p37
      %p39 = scmp.ne.s32.totalorder %s28, %s29
      %p40 = scmp.eq.s32.totalorder %s20, 0
      %p41 = por %p39, %p40
      %p42 = scmp.ne.s32.totalorder %s28, %s29
      %p43 = scmp.eq.s32.totalorder %s21, 1
      %p44 = por %p42, %p43
      %p46 = scmp.ne.s32.totalorder %s29, %s45
      %p47 = scmp.eq.s32.totalorder %s21, 0
      %p48 = por %p46, %p47
      %s50 = sadd.s32 %s49, 1
      %p53 = scmp.eq.s32.totalorder %s15, 1
      %p54 = scmp.ne.s32.totalorder %s49, %s51
      %p55 = scmp.eq.s32.totalorder %s15, 0
      %p56 = por %p54, %p55
      %p57 = scmp.ne.s32.totalorder %s49, %s51
      %p58 = scmp.eq.s32.totalorder %s20, 1
      %p59 = por %p57, %p58
      %p60 = scmp.ne.s32.totalorder %s51, %s52
      %p61 = scmp.eq.s32.totalorder %s20, 0
      %p62 = por %p60, %p61
      %p63 = scmp.ne.s32.totalorder %s51, %s52
      %p64 = scmp.eq.s32.totalorder %s21, 1
      %p65 = por %p63, %p64
      %p67 = scmp.ne.s32.totalorder %s52, %s66
      %p68 = scmp.eq.s32.totalorder %s21, 0
      %p69 = por %p67, %p68
      %s71 = sadd.s32 %s70, 1
      %p74 = scmp.eq.s32.totalorder %s15, 1
      %p75 = scmp.ne.s32.totalorder %s70, %s72
      %p76 = scmp.eq.s32.totalorder %s15, 0
      %p77 = por %p75, %p76
      %p78 = scmp.ne.s32.totalorder %s70, %s72
      %p79 = scmp.eq.s32.totalorder %s20, 1
      %p80 = por %p78, %p79
      %p81 = scmp.ne.s32.totalorder %s72, %s73
      %p82 = scmp.eq.s32.totalorder %s20, 0
      %p83 = por %p81, %p82
      %p84 = scmp.ne.s32.totalorder %s72, %s73
      %p85 = scmp.eq.s32.totalorder %s21, 1
      %p86 = por %p84, %p85
      %p88 = scmp.ne.s32.totalorder %s73, %s87
      %p89 = scmp.eq.s32.totalorder %s21, 0
      %p90 = por %p88, %p89
      %s92 = sadd.s32 %s91, 1
      %p95 = scmp.eq.s32.totalorder %s15, 1
      %p96 = scmp.ne.s32.totalorder %s91, %s93
      %p97 = scmp.eq.s32.totalorder %s15, 0
      %p98 = por %p96, %p97
      %p99 = scmp.ne.s32.totalorder %s91, %s93
      %p100 = scmp.eq.s32.totalorder %s20, 1
      %p101 = por %p99, %p100
      %p102 = scmp.ne.s32.totalorder %s93, %s94
      %p103 = scmp.eq.s32.totalorder %s20, 0
      %p104 = por %p102, %p103
      %p105 = scmp.ne.s32.totalorder %s93, %s94
      %p106 = scmp.eq.s32.totalorder %s21, 1
      %p107 = por %p105, %p106
      %p109 = scmp.ne.s32.totalorder %s94, %s108
      %p110 = scmp.eq.s32.totalorder %s21, 0
      %p111 = por %p109, %p110
      %s113 = sadd.s32 %s112, 1
      %p116 = scmp.eq.s32.totalorder %s15, 1
      %p117 = scmp.ne.s32.totalorder %s112, %s114
      %p118 = scmp.eq.s32.totalorder %s15, 0
      %p119 = por %p117, %p118
      %p120 = scmp.ne.s32.totalorder %s112, %s114
      %p121 = scmp.eq.s32.totalorder %s20, 1
      %p122 = por %p120, %p121
      %p123 = scmp.ne.s32.totalorder %s114, %s115
      %p124 = scmp.eq.s32.totalorder %s20, 0
      %p125 = por %p123, %p124
      %p126 = scmp.ne.s32.totalorder %s114, %s115
      %p127 = scmp.eq.s32.totalorder %s21, 1
      %p128 = por %p126, %p127
      %p130 = scmp.ne.s32.totalorder %s115, %s129
      %p131 = scmp.eq.s32.totalorder %s21, 0
      %p132 = por %p130, %p131
      %s134 = sadd.s32 %s133, 1
      %p137 = scmp.eq.s32.totalorder %s15, 1
      %p138 = scmp.ne.s32.totalorder %s133, %s135
      %p139 = scmp.eq.s32.totalorder %s15, 0
      %p140 = por %p138, %p139
      %p141 = scmp.ne.s32.totalorder %s133, %s135
      %p142 = scmp.eq.s32.totalorder %s20, 1
      %p143 = por %p141, %p142
      %p144 = scmp.ne.s32.totalorder %s135, %s136
      %p145 = scmp.eq.s32.totalorder %s20, 0
      %p146 = por %p144, %p145
      %p147 = scmp.ne.s32.totalorder %s135, %s136
      %p148 = scmp.eq.s32.totalorder %s21, 1
      %p149 = por %p147, %p148
      %p151 = scmp.ne.s32.totalorder %s136, %s150
      %p152 = scmp.eq.s32.totalorder %s21, 0
      %p153 = por %p151, %p152
      %s154 = ssub.s32 %s15, %s22
      %p155 = scmp.eq.s32.totalorder %s154, 0
      %s157 = sadd.s32 %s156, 1
      %s158 = scalar_select %p155, %s156, %s157
      %p161 = pneg %p155
      %p162 = scmp.eq.s32.totalorder %s15, 1
      %p163 = por %p161, %p162
      %p164 = scmp.ne.s32.totalorder %s156, %s159
      %p165 = scmp.eq.s32.totalorder %s15, 0
      %p166 = por %p164, %p165
      %p167 = scmp.ne.s32.totalorder %s156, %s159
      %p168 = scmp.eq.s32.totalorder %s20, 1
      %p169 = por %p167, %p168
      %p170 = scmp.ne.s32.totalorder %s159, %s160
      %p171 = scmp.eq.s32.totalorder %s20, 0
      %p172 = por %p170, %p171
      %p173 = scmp.ne.s32.totalorder %s159, %s160
      %p174 = scmp.eq.s32.totalorder %s21, 1
      %p175 = por %p173, %p174
      %p177 = scmp.ne.s32.totalorder %s160, %s176
      %p178 = scmp.eq.s32.totalorder %s21, 0
      %p179 = por %p177, %p178
      %p180 = scmp.le.s32.totalorder 1, %s15
      %p181 = scmp.lt.s32.totalorder %s15, 3
      %p182 = pnand %p180, %p181
      %p183 = pneg %p182
      // Predicated region
      $region9: #{tpu_custom_call.1} parent=5 // pred_check
        _
      $region10: #{tpu_custom_call.1} parent=5 // pred_check_branch
        %185 = sbr.rel (%p182) target = $region12
      $region11: #{tpu_custom_call.1} parent=5 // pred_region
        %s186 = ssub.s32 %s15, 1
        // Predicated region
        $region13: #{tpu_custom_call.1} parent=11 // pred_check
          %p187 = pneg %p62
        $region14: #{tpu_custom_call.1} parent=11 // pred_check_branch
          %189 = sbr.rel (%p187) target = $region16
        $region15: #{tpu_custom_call.1} parent=11 // pred_region
          _
        $region16: #{tpu_custom_call.1} parent=11 // pred_fallthru
          _
        // Predicated region
        $region17: #{tpu_custom_call.1} parent=11 // pred_check
          %p190 = pneg %p83
        $region18: #{tpu_custom_call.1} parent=11 // pred_check_branch
          %192 = sbr.rel (%p190) target = $region20
        $region19: #{tpu_custom_call.1} parent=11 // pred_region
          _
        $region20: #{tpu_custom_call.1} parent=11 // pred_fallthru
          _
        // Predicated region
        $region21: #{tpu_custom_call.1} parent=11 // pred_check
          %p193 = pneg %p104
        $region22: #{tpu_custom_call.1} parent=11 // pred_check_branch
          %195 = sbr.rel (%p193) target = $region24
        $region23: #{tpu_custom_call.1} parent=11 // pred_region
          _
        $region24: #{tpu_custom_call.1} parent=11 // pred_fallthru
          _
        // Predicated region
        $region25: #{tpu_custom_call.1} parent=11 // pred_check
          %p196 = pneg %p125
        $region26: #{tpu_custom_call.1} parent=11 // pred_check_branch
          %198 = sbr.rel (%p196) target = $region28
        $region27: #{tpu_custom_call.1} parent=11 // pred_region
          _
        $region28: #{tpu_custom_call.1} parent=11 // pred_fallthru
          _
        // Predicated region
        $region29: #{tpu_custom_call.1} parent=11 // pred_check
          %p199 = pneg %p146
        $region30: #{tpu_custom_call.1} parent=11 // pred_check_branch
          %201 = sbr.rel (%p199) target = $region32
        $region31: #{tpu_custom_call.1} parent=11 // pred_region
          _
        $region32: #{tpu_custom_call.1} parent=11 // pred_fallthru
          _
      $region12: #{tpu_custom_call.1} parent=5 // pred_fallthru
        _
      %p202 = scmp.lt.s32.totalorder %s15, 2
      // Predicated region
      $region33: #{tpu_custom_call.1} parent=5 // pred_check
        %p203 = pneg %p202
      $region34: #{tpu_custom_call.1} parent=5 // pred_check_branch
        %205 = sbr.rel (%p203) target = $region36
      $region35: #{tpu_custom_call.1} parent=5 // pred_region
        // Predicated region
        $region37: #{tpu_custom_call.1} parent=35 // pred_check
          %p206 = pneg %p35
        $region38: #{tpu_custom_call.1} parent=35 // pred_check_branch
          %208 = sbr.rel (%p206) target = $region40
        $region39: #{tpu_custom_call.1} parent=35 // pred_region
          %p209 = scmp.lt.s32.totalorder %s15, 1
          %s210 = scalar_select %p209, %s15, 1
          %s211 = smul.addr %s210, 2
          %s212 = smul.addr %s211, 8
          %s213 = scalar_lea.vmem %s0, %s212
        $region40: #{tpu_custom_call.1} parent=35 // pred_fallthru
          _
      $region36: #{tpu_custom_call.1} parent=5 // pred_fallthru
        _
      %p214 = scmp.le.s32.totalorder 1, %s15
      %p215 = scmp.lt.s32.totalorder %s15, 3
      %p216 = pnand %p214, %p215
      %p217 = pneg %p216
      // Predicated region
      $region41: #{tpu_custom_call.1} parent=5 // pred_check
        _
      $region42: #{tpu_custom_call.1} parent=5 // pred_check_branch
        %219 = sbr.rel (%p216) target = $region44
      $region43: #{tpu_custom_call.1} parent=5 // pred_region
        %s220 = ssub.s32 %s15, 1
        %p221 = scmp.lt.s32.totalorder %s20, 1
        %s222 = scalar_select %p221, %s20, 1
        %s223 = smul.addr %s222, 2
        %s224 = smul.addr %s223, 8
        %s225 = scalar_lea.vmem %s0, %s224
        %p226 = pneg %p41
        %p227 = pneg %p38
        %p228 = pneg %p62
        %p229 = pneg %p59
        %p230 = pneg %p83
        %p231 = pneg %p80
        %p232 = pneg %p104
        %p233 = pneg %p101
        %p234 = pneg %p125
        %p235 = pneg %p122
        %p236 = pneg %p146
        %p237 = pneg %p143
        %p238 = pneg %p172
        %p239 = pneg %p169
        %s240 = sand.u32 %s159, 1
        %s241 = scalar_lea.sflag [#allocation3], %s240
        %s242 = sand.u32 %s159, 1
        %s243 = smul.addr %s242, 16
        %s244 = scalar_lea.vmem [#allocation2], %s243
        %p245 = scmp.lt.s32.totalorder %s20, 1
        %s246 = scalar_select %p245, %s20, 1
        %s247 = smul.addr %s246, 2
        %s248 = smul.addr %s247, 8
        %s249 = scalar_lea.vmem %s0, %s248
        %v250 = vld [vmem:[%s249] sm:$0xff]
        %v251 = vld [vmem:[%s249 + $0x8] sm:$0xff]
        %252 = vrot.lane.b32.xlu0 %v250, 17
        %v253 = vpop.permute.xlu0 %252
        %254 = vrot.lane.b32.xlu0 %v251, 17
        %v255 = vpop.permute.xlu0 %254
        %v256 = vlaneseq
        %v257 = vand.u32 %v256, 127
        %vm258 = vcmp.lt.s32.totalorder %v257, 17
        %v259 = vsel %vm258, %v253, %v255
        %v260 = vsel %vm258, %v255, %v253
        %v261 = vld [vmem:[%s5] ss:$8 sm:$0x3]
        %v263 = vlaneseq
        %v264 = vshrl.u32 %v263, 7
        %v265 = vsub.s32 0, %v264
        %v266 = vrot.slane %v261, %v265
        %v267 = vlaneseq
        %v268 = vshrl.u32 %v267, 7
        %v269 = vsub.s32 1, %v268
        %v270 = vrot.slane %v261, %v269
        %v273 = vmul.f32 %v260, %v266
        %v274 = vmul.f32 %v259, %v270
        %v275 = vld [vmem:[%s1] sm:$0xff]
        %276 = vrot.lane.b32.xlu0 %v250, 16
        %v277 = vpop.permute.xlu0 %276
        %278 = vrot.lane.b32.xlu0 %v251, 16
        %v279 = vpop.permute.xlu0 %278
        %vm280 = vcmp.lt.s32.totalorder %v257, 16
        %v281 = vsel %vm280, %v277, %v279
        %v282 = vsel %vm280, %v279, %v277
        %s283 = scalar_lea.vmem %s5, 1
        %v284 = vld [vmem:[%s283] ss:$8 sm:$0x3]
        %v286 = vlaneseq
        %v287 = vshrl.u32 %v286, 7
        %v288 = vsub.s32 0, %v287
        %v289 = vrot.slane %v284, %v288
        %v290 = vlaneseq
        %v291 = vshrl.u32 %v290, 7
        %v292 = vsub.s32 1, %v291
        %v293 = vrot.slane %v284, %v292
        %v296 = vmul.f32 %v282, %v289
        %v297 = vmul.f32 %v281, %v293
        %s298 = scalar_lea.vmem %s1, 8
        %v299 = vld [vmem:[%s298] sm:$0xff]
        %vm300 = vcmask 64512
        %v302 = vsel %vm300, %v299, 0
        %304 = vmatprep.subr.mxu0 %v297
        %305 = vmatpush1.msra.mxu0 %v296
        %306 = vmatprep.subr.mxu0 0.0
        %307 = vmatpush1.msra.mxu0 0.0
        %308 = vmatprep.subr.mxu0 0.0
        %309 = vmatpush1.msra.mxu0 0.0
        %310 = vmatprep.subr.mxu0 0.0
        %311 = vmatpush1.msra.mxu0 0.0
        %312 = vmatprep.subr.mxu0 0.0
        %313 = vmatpush1.msra.mxu0 0.0
        %314 = vmatprep.subr.mxu0 0.0
        %315 = vmatpush1.msra.mxu0 0.0
        %316 = vmatprep.subr.mxu0 0.0
        %317 = vmatpush1.msra.mxu0 0.0
        %318 = vmatprep.subr.mxu0 0.0
        %319 = vmatpush1.msra.mxu0 0.0
        %320 = vmatprep.subr.mxu0 0.0
        %321 = vmatpush1.msra.mxu0 0.0
        %322 = vmatprep.subr.mxu0 0.0
        %323 = vmatpush1.msra.mxu0 0.0
        %324 = vmatprep.subr.mxu0 0.0
        %325 = vmatpush1.msra.mxu0 0.0
        %326 = vmatprep.subr.mxu0 0.0
        %327 = vmatpush1.msra.mxu0 0.0
        %328 = vmatprep.subr.mxu0 0.0
        %329 = vmatpush1.msra.mxu0 0.0
        %330 = vmatprep.subr.mxu0 0.0
        %331 = vmatpush1.msra.mxu0 0.0
        %332 = vmatprep.subr.mxu0 0.0
        %333 = vmatpush1.msra.mxu0 0.0
        %334 = vmatprep.subr.mxu0 0.0
        %335 = vmatpush1.msra.mxu0 0.0
        %336 = vmatprep.subr.mxu0 0.0
        %337 = vmatpush1.msra.mxu0 0.0
        %338 = vmatprep.subr.mxu0 0.0
        %339 = vmatpush1.msra.mxu0 0.0
        %340 = vmatprep.subr.mxu0 0.0
        %341 = vmatpush1.msra.mxu0 0.0
        %342 = vmatprep.subr.mxu0 0.0
        %343 = vmatpush1.msra.mxu0 0.0
        %344 = vmatprep.subr.mxu0 0.0
        %345 = vmatpush1.msra.mxu0 0.0
        %346 = vmatprep.subr.mxu0 0.0
        %347 = vmatpush1.msra.mxu0 0.0
        %348 = vmatprep.subr.mxu0 0.0
        %349 = vmatpush1.msra.mxu0 0.0
        %350 = vmatprep.subr.mxu0 0.0
        %351 = vmatpush1.msra.mxu0 0.0
        %352 = vmatprep.subr.mxu0 0.0
        %353 = vmatpush1.msra.mxu0 0.0
        %354 = vmatprep.subr.mxu0 0.0
        %355 = vmatpush1.msra.mxu0 0.0
        %356 = vmatprep.subr.mxu0 0.0
        %357 = vmatpush1.msra.mxu0 0.0
        %358 = vmatprep.subr.mxu0 0.0
        %359 = vmatpush1.msra.mxu0 0.0
        %360 = vmatprep.subr.mxu0 0.0
        %361 = vmatpush1.msra.mxu0 0.0
        %362 = vmatprep.subr.mxu0 0.0
        %363 = vmatpush1.msra.mxu0 0.0
        %364 = vmatprep.subr.mxu0 0.0
        %365 = vmatpush1.msra.mxu0 0.0
        %366 = vmatprep.subr.mxu0 0.0
        %367 = vmatpush1.msra.mxu0 0.0
        %368 = vmatprep.mubr.f32.mxu0 0.0
        %369 = vmatmul.mubr.f32.gmra.mrb[0].mxu0 %v302
        %v370 = vpop.f32.mrb[0].mxu0
        %v371 = vadd.f32 0.0, %v370
        %v372 = vpop.f32.mrb[0].mxu0
        %v373 = vadd.f32 0.0, %v372
        %374 = vdwg.mxu0
        %v376 = vsel %vm300, %v275, 0
        %378 = vmatprep.subr.mxu0 %v274
        %379 = vmatpush1.msra.mxu0 %v273
        %380 = vmatprep.subr.mxu0 0.0
        %381 = vmatpush1.msra.mxu0 0.0
        %382 = vmatprep.subr.mxu0 0.0
        %383 = vmatpush1.msra.mxu0 0.0
        %384 = vmatprep.subr.mxu0 0.0
        %385 = vmatpush1.msra.mxu0 0.0
        %386 = vmatprep.subr.mxu0 0.0
        %387 = vmatpush1.msra.mxu0 0.0
        %388 = vmatprep.subr.mxu0 0.0
        %389 = vmatpush1.msra.mxu0 0.0
        %390 = vmatprep.subr.mxu0 0.0
        %391 = vmatpush1.msra.mxu0 0.0
        %392 = vmatprep.subr.mxu0 0.0
        %393 = vmatpush1.msra.mxu0 0.0
        %394 = vmatprep.subr.mxu0 0.0
        %395 = vmatpush1.msra.mxu0 0.0
        %396 = vmatprep.subr.mxu0 0.0
        %397 = vmatpush1.msra.mxu0 0.0
        %398 = vmatprep.subr.mxu0 0.0
        %399 = vmatpush1.msra.mxu0 0.0
        %400 = vmatprep.subr.mxu0 0.0
        %401 = vmatpush1.msra.mxu0 0.0
        %402 = vmatprep.subr.mxu0 0.0
        %403 = vmatpush1.msra.mxu0 0.0
        %404 = vmatprep.subr.mxu0 0.0
        %405 = vmatpush1.msra.mxu0 0.0
        %406 = vmatprep.subr.mxu0 0.0
        %407 = vmatpush1.msra.mxu0 0.0
        %408 = vmatprep.subr.mxu0 0.0
        %409 = vmatpush1.msra.mxu0 0.0
        %410 = vmatprep.subr.mxu0 0.0
        %411 = vmatpush1.msra.mxu0 0.0
        %412 = vmatprep.subr.mxu0 0.0
        %413 = vmatpush1.msra.mxu0 0.0
        %414 = vmatprep.subr.mxu0 0.0
        %415 = vmatpush1.msra.mxu0 0.0
        %416 = vmatprep.subr.mxu0 0.0
        %417 = vmatpush1.msra.mxu0 0.0
        %418 = vmatprep.subr.mxu0 0.0
        %419 = vmatpush1.msra.mxu0 0.0
        %420 = vmatprep.subr.mxu0 0.0
        %421 = vmatpush1.msra.mxu0 0.0
        %422 = vmatprep.subr.mxu0 0.0
        %423 = vmatpush1.msra.mxu0 0.0
        %424 = vmatprep.subr.mxu0 0.0
        %425 = vmatpush1.msra.mxu0 0.0
        %426 = vmatprep.subr.mxu0 0.0
        %427 = vmatpush1.msra.mxu0 0.0
        %428 = vmatprep.subr.mxu0 0.0
        %429 = vmatpush1.msra.mxu0 0.0
        %430 = vmatprep.subr.mxu0 0.0
        %431 = vmatpush1.msra.mxu0 0.0
        %432 = vmatprep.subr.mxu0 0.0
        %433 = vmatpush1.msra.mxu0 0.0
        %434 = vmatprep.subr.mxu0 0.0
        %435 = vmatpush1.msra.mxu0 0.0
        %436 = vmatprep.subr.mxu0 0.0
        %437 = vmatpush1.msra.mxu0 0.0
        %438 = vmatprep.subr.mxu0 0.0
        %439 = vmatpush1.msra.mxu0 0.0
        %440 = vmatprep.subr.mxu0 0.0
        %441 = vmatpush1.msra.mxu0 0.0
        %442 = vmatprep.mubr.f32.mxu0 0.0
        %443 = vmatmul.mubr.f32.gmra.mrb[0].mxu0 %v376
        %v444 = vpop.f32.mrb[0].mxu0
        %v445 = vadd.f32 %v371, %v444
        %v446 = vpop.f32.mrb[0].mxu0
        %v447 = vadd.f32 %v373, %v446
        %448 = vdwg.mxu0
        %449 = vrot.lane.b32.xlu0 %v250, 15
        %v450 = vpop.permute.xlu0 %449
        %451 = vrot.lane.b32.xlu0 %v251, 15
        %v452 = vpop.permute.xlu0 %451
        %vm453 = vcmp.lt.s32.totalorder %v257, 15
        %v454 = vsel %vm453, %v450, %v452
        %v455 = vsel %vm453, %v452, %v450
        %s456 = scalar_lea.vmem %s5, 2
        %v457 = vld [vmem:[%s456] ss:$8 sm:$0x3]
        %v459 = vlaneseq
        %v460 = vshrl.u32 %v459, 7
        %v461 = vsub.s32 0, %v460
        %v462 = vrot.slane %v457, %v461
        %v463 = vlaneseq
        %v464 = vshrl.u32 %v463, 7
        %v465 = vsub.s32 1, %v464
        %v466 = vrot.slane %v457, %v465
        %v469 = vmul.f32 %v455, %v462
        %v470 = vmul.f32 %v454, %v466
        %s471 = scalar_lea.vmem %s1, 16
        %v472 = vld [vmem:[%s471] sm:$0xff]
        %v474 = vsel %vm300, %v472, 0
        %476 = vmatprep.subr.mxu0 %v470
        %477 = vmatpush1.msra.mxu0 %v469
        %478 = vmatprep.subr.mxu0 0.0
        %479 = vmatpush1.msra.mxu0 0.0
        %480 = vmatprep.subr.mxu0 0.0
        %481 = vmatpush1.msra.mxu0 0.0
        %482 = vmatprep.subr.mxu0 0.0
        %483 = vmatpush1.msra.mxu0 0.0
        %484 = vmatprep.subr.mxu0 0.0
        %485 = vmatpush1.msra.mxu0 0.0
        %486 = vmatprep.subr.mxu0 0.0
        %487 = vmatpush1.msra.mxu0 0.0
        %488 = vmatprep.subr.mxu0 0.0
        %489 = vmatpush1.msra.mxu0 0.0
        %490 = vmatprep.subr.mxu0 0.0
        %491 = vmatpush1.msra.mxu0 0.0
        %492 = vmatprep.subr.mxu0 0.0
        %493 = vmatpush1.msra.mxu0 0.0
        %494 = vmatprep.subr.mxu0 0.0
        %495 = vmatpush1.msra.mxu0 0.0
        %496 = vmatprep.subr.mxu0 0.0
        %497 = vmatpush1.msra.mxu0 0.0
        %498 = vmatprep.subr.mxu0 0.0
        %499 = vmatpush1.msra.mxu0 0.0
        %500 = vmatprep.subr.mxu0 0.0
        %501 = vmatpush1.msra.mxu0 0.0
        %502 = vmatprep.subr.mxu0 0.0
        %503 = vmatpush1.msra.mxu0 0.0
        %504 = vmatprep.subr.mxu0 0.0
        %505 = vmatpush1.msra.mxu0 0.0
        %506 = vmatprep.subr.mxu0 0.0
        %507 = vmatpush1.msra.mxu0 0.0
        %508 = vmatprep.subr.mxu0 0.0
        %509 = vmatpush1.msra.mxu0 0.0
        %510 = vmatprep.subr.mxu0 0.0
        %511 = vmatpush1.msra.mxu0 0.0
        %512 = vmatprep.subr.mxu0 0.0
        %513 = vmatpush1.msra.mxu0 0.0
        %514 = vmatprep.subr.mxu0 0.0
        %515 = vmatpush1.msra.mxu0 0.0
        %516 = vmatprep.subr.mxu0 0.0
        %517 = vmatpush1.msra.mxu0 0.0
        %518 = vmatprep.subr.mxu0 0.0
        %519 = vmatpush1.msra.mxu0 0.0
        %520 = vmatprep.subr.mxu0 0.0
        %521 = vmatpush1.msra.mxu0 0.0
        %522 = vmatprep.subr.mxu0 0.0
        %523 = vmatpush1.msra.mxu0 0.0
        %524 = vmatprep.subr.mxu0 0.0
        %525 = vmatpush1.msra.mxu0 0.0
        %526 = vmatprep.subr.mxu0 0.0
        %527 = vmatpush1.msra.mxu0 0.0
        %528 = vmatprep.subr.mxu0 0.0
        %529 = vmatpush1.msra.mxu0 0.0
        %530 = vmatprep.subr.mxu0 0.0
        %531 = vmatpush1.msra.mxu0 0.0
        %532 = vmatprep.subr.mxu0 0.0
        %533 = vmatpush1.msra.mxu0 0.0
        %534 = vmatprep.subr.mxu0 0.0
        %535 = vmatpush1.msra.mxu0 0.0
        %536 = vmatprep.subr.mxu0 0.0
        %537 = vmatpush1.msra.mxu0 0.0
        %538 = vmatprep.subr.mxu0 0.0
        %539 = vmatpush1.msra.mxu0 0.0
        %540 = vmatprep.mubr.f32.mxu0 0.0
        %541 = vmatmul.mubr.f32.gmra.mrb[0].mxu0 %v474
        %v542 = vpop.f32.mrb[0].mxu0
        %v543 = vadd.f32 0.0, %v542
        %v544 = vpop.f32.mrb[0].mxu0
        %v545 = vadd.f32 0.0, %v544
        %546 = vdwg.mxu0
        %v547 = vadd.f32 %v445, %v543
        %v548 = vadd.f32 %v447, %v545
        %549 = vrot.lane.b32.xlu0 %v250, 1
        %v550 = vpop.permute.xlu0 %549
        %551 = vrot.lane.b32.xlu0 %v251, 1
        %v552 = vpop.permute.xlu0 %551
        %vm553 = vcmp.lt.s32.totalorder %v257, 1
        %v554 = vsel %vm553, %v550, %v552
        %v555 = vsel %vm553, %v552, %v550
        %s556 = scalar_lea.vmem %s5, 3
        %v557 = vld [vmem:[%s556] ss:$8 sm:$0x3]
        %v559 = vlaneseq
        %v560 = vshrl.u32 %v559, 7
        %v561 = vsub.s32 0, %v560
        %v562 = vrot.slane %v557, %v561
        %v563 = vlaneseq
        %v564 = vshrl.u32 %v563, 7
        %v565 = vsub.s32 1, %v564
        %v566 = vrot.slane %v557, %v565
        %v569 = vmul.f32 %v555, %v562
        %v570 = vmul.f32 %v554, %v566
        %s571 = scalar_lea.vmem %s1, 24
        %v572 = vld [vmem:[%s571] sm:$0xff]
        %v574 = vsel %vm300, %v572, 0
        %576 = vmatprep.subr.mxu0 %v570
        %577 = vmatpush1.msra.mxu0 %v569
        %578 = vmatprep.subr.mxu0 0.0
        %579 = vmatpush1.msra.mxu0 0.0
        %580 = vmatprep.subr.mxu0 0.0
        %581 = vmatpush1.msra.mxu0 0.0
        %582 = vmatprep.subr.mxu0 0.0
        %583 = vmatpush1.msra.mxu0 0.0
        %584 = vmatprep.subr.mxu0 0.0
        %585 = vmatpush1.msra.mxu0 0.0
        %586 = vmatprep.subr.mxu0 0.0
        %587 = vmatpush1.msra.mxu0 0.0
        %588 = vmatprep.subr.mxu0 0.0
        %589 = vmatpush1.msra.mxu0 0.0
        %590 = vmatprep.subr.mxu0 0.0
        %591 = vmatpush1.msra.mxu0 0.0
        %592 = vmatprep.subr.mxu0 0.0
        %593 = vmatpush1.msra.mxu0 0.0
        %594 = vmatprep.subr.mxu0 0.0
        %595 = vmatpush1.msra.mxu0 0.0
        %596 = vmatprep.subr.mxu0 0.0
        %597 = vmatpush1.msra.mxu0 0.0
        %598 = vmatprep.subr.mxu0 0.0
        %599 = vmatpush1.msra.mxu0 0.0
        %600 = vmatprep.subr.mxu0 0.0
        %601 = vmatpush1.msra.mxu0 0.0
        %602 = vmatprep.subr.mxu0 0.0
        %603 = vmatpush1.msra.mxu0 0.0
        %604 = vmatprep.subr.mxu0 0.0
        %605 = vmatpush1.msra.mxu0 0.0
        %606 = vmatprep.subr.mxu0 0.0
        %607 = vmatpush1.msra.mxu0 0.0
        %608 = vmatprep.subr.mxu0 0.0
        %609 = vmatpush1.msra.mxu0 0.0
        %610 = vmatprep.subr.mxu0 0.0
        %611 = vmatpush1.msra.mxu0 0.0
        %612 = vmatprep.subr.mxu0 0.0
        %613 = vmatpush1.msra.mxu0 0.0
        %614 = vmatprep.subr.mxu0 0.0
        %615 = vmatpush1.msra.mxu0 0.0
        %616 = vmatprep.subr.mxu0 0.0
        %617 = vmatpush1.msra.mxu0 0.0
        %618 = vmatprep.subr.mxu0 0.0
        %619 = vmatpush1.msra.mxu0 0.0
        %620 = vmatprep.subr.mxu0 0.0
        %621 = vmatpush1.msra.mxu0 0.0
        %622 = vmatprep.subr.mxu0 0.0
        %623 = vmatpush1.msra.mxu0 0.0
        %624 = vmatprep.subr.mxu0 0.0
        %625 = vmatpush1.msra.mxu0 0.0
        %626 = vmatprep.subr.mxu0 0.0
        %627 = vmatpush1.msra.mxu0 0.0
        %628 = vmatprep.subr.mxu0 0.0
        %629 = vmatpush1.msra.mxu0 0.0
        %630 = vmatprep.subr.mxu0 0.0
        %631 = vmatpush1.msra.mxu0 0.0
        %632 = vmatprep.subr.mxu0 0.0
        %633 = vmatpush1.msra.mxu0 0.0
        %634 = vmatprep.subr.mxu0 0.0
        %635 = vmatpush1.msra.mxu0 0.0
        %636 = vmatprep.subr.mxu0 0.0
        %637 = vmatpush1.msra.mxu0 0.0
        %638 = vmatprep.subr.mxu0 0.0
        %639 = vmatpush1.msra.mxu0 0.0
        %640 = vmatprep.mubr.f32.mxu0 0.0
        %641 = vmatmul.mubr.f32.gmra.mrb[0].mxu0 %v574
        %v642 = vpop.f32.mrb[0].mxu0
        %v643 = vadd.f32 0.0, %v642
        %v644 = vpop.f32.mrb[0].mxu0
        %v645 = vadd.f32 0.0, %v644
        %646 = vdwg.mxu0
        %v647 = vadd.f32 %v547, %v643
        %v648 = vadd.f32 %v548, %v645
        %s649 = scalar_lea.vmem %s1, 32
        %v650 = vld [vmem:[%s649] sm:$0xff]
        %v652 = vsel %vm300, %v650, 0
        %654 = vmatprep.subr.mxu0 %v251
        %655 = vmatpush1.msra.mxu0 %v250
        %656 = vmatprep.subr.mxu0 0.0
        %657 = vmatpush1.msra.mxu0 0.0
        %658 = vmatprep.subr.mxu0 0.0
        %659 = vmatpush1.msra.mxu0 0.0
        %660 = vmatprep.subr.mxu0 0.0
        %661 = vmatpush1.msra.mxu0 0.0
        %662 = vmatprep.subr.mxu0 0.0
        %663 = vmatpush1.msra.mxu0 0.0
        %664 = vmatprep.subr.mxu0 0.0
        %665 = vmatpush1.msra.mxu0 0.0
        %666 = vmatprep.subr.mxu0 0.0
        %667 = vmatpush1.msra.mxu0 0.0
        %668 = vmatprep.subr.mxu0 0.0
        %669 = vmatpush1.msra.mxu0 0.0
        %670 = vmatprep.subr.mxu0 0.0
        %671 = vmatpush1.msra.mxu0 0.0
        %672 = vmatprep.subr.mxu0 0.0
        %673 = vmatpush1.msra.mxu0 0.0
        %674 = vmatprep.subr.mxu0 0.0
        %675 = vmatpush1.msra.mxu0 0.0
        %676 = vmatprep.subr.mxu0 0.0
        %677 = vmatpush1.msra.mxu0 0.0
        %678 = vmatprep.subr.mxu0 0.0
        %679 = vmatpush1.msra.mxu0 0.0
        %680 = vmatprep.subr.mxu0 0.0
        %681 = vmatpush1.msra.mxu0 0.0
        %682 = vmatprep.subr.mxu0 0.0
        %683 = vmatpush1.msra.mxu0 0.0
        %684 = vmatprep.subr.mxu0 0.0
        %685 = vmatpush1.msra.mxu0 0.0
        %686 = vmatprep.subr.mxu0 0.0
        %687 = vmatpush1.msra.mxu0 0.0
        %688 = vmatprep.subr.mxu0 0.0
        %689 = vmatpush1.msra.mxu0 0.0
        %690 = vmatprep.subr.mxu0 0.0
        %691 = vmatpush1.msra.mxu0 0.0
        %692 = vmatprep.subr.mxu0 0.0
        %693 = vmatpush1.msra.mxu0 0.0
        %694 = vmatprep.subr.mxu0 0.0
        %695 = vmatpush1.msra.mxu0 0.0
        %696 = vmatprep.subr.mxu0 0.0
        %697 = vmatpush1.msra.mxu0 0.0
        %698 = vmatprep.subr.mxu0 0.0
        %699 = vmatpush1.msra.mxu0 0.0
        %700 = vmatprep.subr.mxu0 0.0
        %701 = vmatpush1.msra.mxu0 0.0
        %702 = vmatprep.subr.mxu0 0.0
        %703 = vmatpush1.msra.mxu0 0.0
        %704 = vmatprep.subr.mxu0 0.0
        %705 = vmatpush1.msra.mxu0 0.0
        %706 = vmatprep.subr.mxu0 0.0
        %707 = vmatpush1.msra.mxu0 0.0
        %708 = vmatprep.subr.mxu0 0.0
        %709 = vmatpush1.msra.mxu0 0.0
        %710 = vmatprep.subr.mxu0 0.0
        %711 = vmatpush1.msra.mxu0 0.0
        %712 = vmatprep.subr.mxu0 0.0
        %713 = vmatpush1.msra.mxu0 0.0
        %714 = vmatprep.subr.mxu0 0.0
        %715 = vmatpush1.msra.mxu0 0.0
        %716 = vmatprep.subr.mxu0 0.0
        %717 = vmatpush1.msra.mxu0 0.0
        %718 = vmatprep.mubr.f32.mxu0 0.0
        %719 = vmatmul.mubr.f32.gmra.mrb[0].mxu0 %v652
        %v720 = vpop.f32.mrb[0].mxu0
        %v721 = vadd.f32 0.0, %v720
        %v722 = vpop.f32.mrb[0].mxu0
        %v723 = vadd.f32 0.0, %v722
        %724 = vdwg.mxu0
        %v725 = vadd.f32 %v647, %v721
        %v726 = vadd.f32 %v648, %v723
        %727 = vrot.lane.b32.xlu0 %v250, 127
        %v728 = vpop.permute.xlu0 %727
        %729 = vrot.lane.b32.xlu0 %v251, 127
        %v730 = vpop.permute.xlu0 %729
        %vm731 = vcmp.lt.s32.totalorder %v257, 127
        %v732 = vsel %vm731, %v728, %v730
        %v733 = vsel %vm731, %v730, %v728
        %s734 = scalar_lea.vmem %s5, 5
        %v735 = vld [vmem:[%s734] ss:$8 sm:$0x3]
        %v737 = vlaneseq
        %v738 = vshrl.u32 %v737, 7
        %v739 = vsub.s32 0, %v738
        %v740 = vrot.slane %v735, %v739
        %v741 = vlaneseq
        %v742 = vshrl.u32 %v741, 7
        %v743 = vsub.s32 1, %v742
        %v744 = vrot.slane %v735, %v743
        %v747 = vmul.f32 %v732, %v740
        %v748 = vmul.f32 %v733, %v744
        %s749 = scalar_lea.vmem %s1, 40
        %v750 = vld [vmem:[%s749] sm:$0xff]
        %v752 = vsel %vm300, %v750, 0
        %754 = vmatprep.subr.mxu0 %v748
        %755 = vmatpush1.msra.mxu0 %v747
        %756 = vmatprep.subr.mxu0 0.0
        %757 = vmatpush1.msra.mxu0 0.0
        %758 = vmatprep.subr.mxu0 0.0
        %759 = vmatpush1.msra.mxu0 0.0
        %760 = vmatprep.subr.mxu0 0.0
        %761 = vmatpush1.msra.mxu0 0.0
        %762 = vmatprep.subr.mxu0 0.0
        %763 = vmatpush1.msra.mxu0 0.0
        %764 = vmatprep.subr.mxu0 0.0
        %765 = vmatpush1.msra.mxu0 0.0
        %766 = vmatprep.subr.mxu0 0.0
        %767 = vmatpush1.msra.mxu0 0.0
        %768 = vmatprep.subr.mxu0 0.0
        %769 = vmatpush1.msra.mxu0 0.0
        %770 = vmatprep.subr.mxu0 0.0
        %771 = vmatpush1.msra.mxu0 0.0
        %772 = vmatprep.subr.mxu0 0.0
        %773 = vmatpush1.msra.mxu0 0.0
        %774 = vmatprep.subr.mxu0 0.0
        %775 = vmatpush1.msra.mxu0 0.0
        %776 = vmatprep.subr.mxu0 0.0
        %777 = vmatpush1.msra.mxu0 0.0
        %778 = vmatprep.subr.mxu0 0.0
        %779 = vmatpush1.msra.mxu0 0.0
        %780 = vmatprep.subr.mxu0 0.0
        %781 = vmatpush1.msra.mxu0 0.0
        %782 = vmatprep.subr.mxu0 0.0
        %783 = vmatpush1.msra.mxu0 0.0
        %784 = vmatprep.subr.mxu0 0.0
        %785 = vmatpush1.msra.mxu0 0.0
        %786 = vmatprep.subr.mxu0 0.0
        %787 = vmatpush1.msra.mxu0 0.0
        %788 = vmatprep.subr.mxu0 0.0
        %789 = vmatpush1.msra.mxu0 0.0
        %790 = vmatprep.subr.mxu0 0.0
        %791 = vmatpush1.msra.mxu0 0.0
        %792 = vmatprep.subr.mxu0 0.0
        %793 = vmatpush1.msra.mxu0 0.0
        %794 = vmatprep.subr.mxu0 0.0
        %795 = vmatpush1.msra.mxu0 0.0
        %796 = vmatprep.subr.mxu0 0.0
        %797 = vmatpush1.msra.mxu0 0.0
        %798 = vmatprep.subr.mxu0 0.0
        %799 = vmatpush1.msra.mxu0 0.0
        %800 = vmatprep.subr.mxu0 0.0
        %801 = vmatpush1.msra.mxu0 0.0
        %802 = vmatprep.subr.mxu0 0.0
        %803 = vmatpush1.msra.mxu0 0.0
        %804 = vmatprep.subr.mxu0 0.0
        %805 = vmatpush1.msra.mxu0 0.0
        %806 = vmatprep.subr.mxu0 0.0
        %807 = vmatpush1.msra.mxu0 0.0
        %808 = vmatprep.subr.mxu0 0.0
        %809 = vmatpush1.msra.mxu0 0.0
        %810 = vmatprep.subr.mxu0 0.0
        %811 = vmatpush1.msra.mxu0 0.0
        %812 = vmatprep.subr.mxu0 0.0
        %813 = vmatpush1.msra.mxu0 0.0
        %814 = vmatprep.subr.mxu0 0.0
        %815 = vmatpush1.msra.mxu0 0.0
        %816 = vmatprep.subr.mxu0 0.0
        %817 = vmatpush1.msra.mxu0 0.0
        %818 = vmatprep.mubr.f32.mxu0 0.0
        %819 = vmatmul.mubr.f32.gmra.mrb[0].mxu0 %v752
        %v820 = vpop.f32.mrb[0].mxu0
        %v821 = vadd.f32 0.0, %v820
        %v822 = vpop.f32.mrb[0].mxu0
        %v823 = vadd.f32 0.0, %v822
        %824 = vdwg.mxu0
        %v825 = vadd.f32 %v725, %v821
        %v826 = vadd.f32 %v726, %v823
        %827 = vrot.lane.b32.xlu0 %v250, 113
        %v828 = vpop.permute.xlu0 %827
        %829 = vrot.lane.b32.xlu0 %v251, 113
        %v830 = vpop.permute.xlu0 %829
        %vm831 = vcmp.lt.s32.totalorder %v257, 113
        %v832 = vsel %vm831, %v828, %v830
        %v833 = vsel %vm831, %v830, %v828
        %s834 = scalar_lea.vmem %s5, 6
        %v835 = vld [vmem:[%s834] ss:$8 sm:$0x3]
        %v837 = vlaneseq
        %v838 = vshrl.u32 %v837, 7
        %v839 = vsub.s32 0, %v838
        %v840 = vrot.slane %v835, %v839
        %v841 = vlaneseq
        %v842 = vshrl.u32 %v841, 7
        %v843 = vsub.s32 1, %v842
        %v844 = vrot.slane %v835, %v843
        %v847 = vmul.f32 %v832, %v840
        %v848 = vmul.f32 %v833, %v844
        %s849 = scalar_lea.vmem %s1, 48
        %v850 = vld [vmem:[%s849] sm:$0xff]
        %v852 = vsel %vm300, %v850, 0
        %854 = vmatprep.subr.mxu0 %v848
        %855 = vmatpush1.msra.mxu0 %v847
        %856 = vmatprep.subr.mxu0 0.0
        %857 = vmatpush1.msra.mxu0 0.0
        %858 = vmatprep.subr.mxu0 0.0
        %859 = vmatpush1.msra.mxu0 0.0
        %860 = vmatprep.subr.mxu0 0.0
        %861 = vmatpush1.msra.mxu0 0.0
        %862 = vmatprep.subr.mxu0 0.0
        %863 = vmatpush1.msra.mxu0 0.0
        %864 = vmatprep.subr.mxu0 0.0
        %865 = vmatpush1.msra.mxu0 0.0
        %866 = vmatprep.subr.mxu0 0.0
        %867 = vmatpush1.msra.mxu0 0.0
        %868 = vmatprep.subr.mxu0 0.0
        %869 = vmatpush1.msra.mxu0 0.0
        %870 = vmatprep.subr.mxu0 0.0
        %871 = vmatpush1.msra.mxu0 0.0
        %872 = vmatprep.subr.mxu0 0.0
        %873 = vmatpush1.msra.mxu0 0.0
        %874 = vmatprep.subr.mxu0 0.0
        %875 = vmatpush1.msra.mxu0 0.0
        %876 = vmatprep.subr.mxu0 0.0
        %877 = vmatpush1.msra.mxu0 0.0
        %878 = vmatprep.subr.mxu0 0.0
        %879 = vmatpush1.msra.mxu0 0.0
        %880 = vmatprep.subr.mxu0 0.0
        %881 = vmatpush1.msra.mxu0 0.0
        %882 = vmatprep.subr.mxu0 0.0
        %883 = vmatpush1.msra.mxu0 0.0
        %884 = vmatprep.subr.mxu0 0.0
        %885 = vmatpush1.msra.mxu0 0.0
        %886 = vmatprep.subr.mxu0 0.0
        %887 = vmatpush1.msra.mxu0 0.0
        %888 = vmatprep.subr.mxu0 0.0
        %889 = vmatpush1.msra.mxu0 0.0
        %890 = vmatprep.subr.mxu0 0.0
        %891 = vmatpush1.msra.mxu0 0.0
        %892 = vmatprep.subr.mxu0 0.0
        %893 = vmatpush1.msra.mxu0 0.0
        %894 = vmatprep.subr.mxu0 0.0
        %895 = vmatpush1.msra.mxu0 0.0
        %896 = vmatprep.subr.mxu0 0.0
        %897 = vmatpush1.msra.mxu0 0.0
        %898 = vmatprep.subr.mxu0 0.0
        %899 = vmatpush1.msra.mxu0 0.0
        %900 = vmatprep.subr.mxu0 0.0
        %901 = vmatpush1.msra.mxu0 0.0
        %902 = vmatprep.subr.mxu0 0.0
        %903 = vmatpush1.msra.mxu0 0.0
        %904 = vmatprep.subr.mxu0 0.0
        %905 = vmatpush1.msra.mxu0 0.0
        %906 = vmatprep.subr.mxu0 0.0
        %907 = vmatpush1.msra.mxu0 0.0
        %908 = vmatprep.subr.mxu0 0.0
        %909 = vmatpush1.msra.mxu0 0.0
        %910 = vmatprep.subr.mxu0 0.0
        %911 = vmatpush1.msra.mxu0 0.0
        %912 = vmatprep.subr.mxu0 0.0
        %913 = vmatpush1.msra.mxu0 0.0
        %914 = vmatprep.subr.mxu0 0.0
        %915 = vmatpush1.msra.mxu0 0.0
        %916 = vmatprep.subr.mxu0 0.0
        %917 = vmatpush1.msra.mxu0 0.0
        %918 = vmatprep.mubr.f32.mxu0 0.0
        %919 = vmatmul.mubr.f32.gmra.mrb[0].mxu0 %v852
        %v920 = vpop.f32.mrb[0].mxu0
        %v921 = vadd.f32 0.0, %v920
        %v922 = vpop.f32.mrb[0].mxu0
        %v923 = vadd.f32 0.0, %v922
        %924 = vdwg.mxu0
        %v925 = vadd.f32 %v825, %v921
        %v926 = vadd.f32 %v826, %v923
        %927 = vrot.lane.b32.xlu0 %v250, 112
        %v928 = vpop.permute.xlu0 %927
        %929 = vrot.lane.b32.xlu0 %v251, 112
        %v930 = vpop.permute.xlu0 %929
        %vm931 = vcmp.lt.s32.totalorder %v257, 112
        %v932 = vsel %vm931, %v928, %v930
        %v933 = vsel %vm931, %v930, %v928
        %s934 = scalar_lea.vmem %s5, 7
        %v935 = vld [vmem:[%s934] ss:$8 sm:$0x3]
        %v937 = vlaneseq
        %v938 = vshrl.u32 %v937, 7
        %v939 = vsub.s32 0, %v938
        %v940 = vrot.slane %v935, %v939
        %v941 = vlaneseq
        %v942 = vshrl.u32 %v941, 7
        %v943 = vsub.s32 1, %v942
        %v944 = vrot.slane %v935, %v943
        %v947 = vmul.f32 %v932, %v940
        %v948 = vmul.f32 %v933, %v944
        %s949 = scalar_lea.vmem %s1, 56
        %v950 = vld [vmem:[%s949] sm:$0xff]
        %v952 = vsel %vm300, %v950, 0
        %954 = vmatprep.subr.mxu0 %v948
        %955 = vmatpush1.msra.mxu0 %v947
        %956 = vmatprep.subr.mxu0 0.0
        %957 = vmatpush1.msra.mxu0 0.0
        %958 = vmatprep.subr.mxu0 0.0
        %959 = vmatpush1.msra.mxu0 0.0
        %960 = vmatprep.subr.mxu0 0.0
        %961 = vmatpush1.msra.mxu0 0.0
        %962 = vmatprep.subr.mxu0 0.0
        %963 = vmatpush1.msra.mxu0 0.0
        %964 = vmatprep.subr.mxu0 0.0
        %965 = vmatpush1.msra.mxu0 0.0
        %966 = vmatprep.subr.mxu0 0.0
        %967 = vmatpush1.msra.mxu0 0.0
        %968 = vmatprep.subr.mxu0 0.0
        %969 = vmatpush1.msra.mxu0 0.0
        %970 = vmatprep.subr.mxu0 0.0
        %971 = vmatpush1.msra.mxu0 0.0
        %972 = vmatprep.subr.mxu0 0.0
        %973 = vmatpush1.msra.mxu0 0.0
        %974 = vmatprep.subr.mxu0 0.0
        %975 = vmatpush1.msra.mxu0 0.0
        %976 = vmatprep.subr.mxu0 0.0
        %977 = vmatpush1.msra.mxu0 0.0
        %978 = vmatprep.subr.mxu0 0.0
        %979 = vmatpush1.msra.mxu0 0.0
        %980 = vmatprep.subr.mxu0 0.0
        %981 = vmatpush1.msra.mxu0 0.0
        %982 = vmatprep.subr.mxu0 0.0
        %983 = vmatpush1.msra.mxu0 0.0
        %984 = vmatprep.subr.mxu0 0.0
        %985 = vmatpush1.msra.mxu0 0.0
        %986 = vmatprep.subr.mxu0 0.0
        %987 = vmatpush1.msra.mxu0 0.0
        %988 = vmatprep.subr.mxu0 0.0
        %989 = vmatpush1.msra.mxu0 0.0
        %990 = vmatprep.subr.mxu0 0.0
        %991 = vmatpush1.msra.mxu0 0.0
        %992 = vmatprep.subr.mxu0 0.0
        %993 = vmatpush1.msra.mxu0 0.0
        %994 = vmatprep.subr.mxu0 0.0
        %995 = vmatpush1.msra.mxu0 0.0
        %996 = vmatprep.subr.mxu0 0.0
        %997 = vmatpush1.msra.mxu0 0.0
        %998 = vmatprep.subr.mxu0 0.0
        %999 = vmatpush1.msra.mxu0 0.0
        %1000 = vmatprep.subr.mxu0 0.0
        %1001 = vmatpush1.msra.mxu0 0.0
        %1002 = vmatprep.subr.mxu0 0.0
        %1003 = vmatpush1.msra.mxu0 0.0
        %1004 = vmatprep.subr.mxu0 0.0
        %1005 = vmatpush1.msra.mxu0 0.0
        %1006 = vmatprep.subr.mxu0 0.0
        %1007 = vmatpush1.msra.mxu0 0.0
        %1008 = vmatprep.subr.mxu0 0.0
        %1009 = vmatpush1.msra.mxu0 0.0
        %1010 = vmatprep.subr.mxu0 0.0
        %1011 = vmatpush1.msra.mxu0 0.0
        %1012 = vmatprep.subr.mxu0 0.0
        %1013 = vmatpush1.msra.mxu0 0.0
        %1014 = vmatprep.subr.mxu0 0.0
        %1015 = vmatpush1.msra.mxu0 0.0
        %1016 = vmatprep.subr.mxu0 0.0
        %1017 = vmatpush1.msra.mxu0 0.0
        %1018 = vmatprep.mubr.f32.mxu0 0.0
        %1019 = vmatmul.mubr.f32.gmra.mrb[0].mxu0 %v952
        %v1020 = vpop.f32.mrb[0].mxu0
        %v1021 = vadd.f32 0.0, %v1020
        %v1022 = vpop.f32.mrb[0].mxu0
        %v1023 = vadd.f32 0.0, %v1022
        %1024 = vdwg.mxu0
        %v1025 = vadd.f32 %v925, %v1021
        %v1026 = vadd.f32 %v926, %v1023
        %1027 = vrot.lane.b32.xlu0 %v250, 111
        %v1028 = vpop.permute.xlu0 %1027
        %1029 = vrot.lane.b32.xlu0 %v251, 111
        %v1030 = vpop.permute.xlu0 %1029
        %vm1031 = vcmp.lt.s32.totalorder %v257, 111
        %v1032 = vsel %vm1031, %v1028, %v1030
        %v1033 = vsel %vm1031, %v1030, %v1028
        %s1034 = scalar_lea.vmem %s5, 16
        %v1035 = vld [vmem:[%s1034] ss:$8 sm:$0x3]
        %v1037 = vlaneseq
        %v1038 = vshrl.u32 %v1037, 7
        %v1039 = vsub.s32 0, %v1038
        %v1040 = vrot.slane %v1035, %v1039
        %v1041 = vlaneseq
        %v1042 = vshrl.u32 %v1041, 7
        %v1043 = vsub.s32 1, %v1042
        %v1044 = vrot.slane %v1035, %v1043
        %v1047 = vmul.f32 %v1032, %v1040
        %v1048 = vmul.f32 %v1033, %v1044
        %s1049 = scalar_lea.vmem %s1, 64
        %v1050 = vld [vmem:[%s1049] sm:$0xff]
        %v1052 = vsel %vm300, %v1050, 0
        %1054 = vmatprep.subr.mxu0 %v1048
        %1055 = vmatpush1.msra.mxu0 %v1047
        %1056 = vmatprep.subr.mxu0 0.0
        %1057 = vmatpush1.msra.mxu0 0.0
        %1058 = vmatprep.subr.mxu0 0.0
        %1059 = vmatpush1.msra.mxu0 0.0
        %1060 = vmatprep.subr.mxu0 0.0
        %1061 = vmatpush1.msra.mxu0 0.0
        %1062 = vmatprep.subr.mxu0 0.0
        %1063 = vmatpush1.msra.mxu0 0.0
        %1064 = vmatprep.subr.mxu0 0.0
        %1065 = vmatpush1.msra.mxu0 0.0
        %1066 = vmatprep.subr.mxu0 0.0
        %1067 = vmatpush1.msra.mxu0 0.0
        %1068 = vmatprep.subr.mxu0 0.0
        %1069 = vmatpush1.msra.mxu0 0.0
        %1070 = vmatprep.subr.mxu0 0.0
        %1071 = vmatpush1.msra.mxu0 0.0
        %1072 = vmatprep.subr.mxu0 0.0
        %1073 = vmatpush1.msra.mxu0 0.0
        %1074 = vmatprep.subr.mxu0 0.0
        %1075 = vmatpush1.msra.mxu0 0.0
        %1076 = vmatprep.subr.mxu0 0.0
        %1077 = vmatpush1.msra.mxu0 0.0
        %1078 = vmatprep.subr.mxu0 0.0
        %1079 = vmatpush1.msra.mxu0 0.0
        %1080 = vmatprep.subr.mxu0 0.0
        %1081 = vmatpush1.msra.mxu0 0.0
        %1082 = vmatprep.subr.mxu0 0.0
        %1083 = vmatpush1.msra.mxu0 0.0
        %1084 = vmatprep.subr.mxu0 0.0
        %1085 = vmatpush1.msra.mxu0 0.0
        %1086 = vmatprep.subr.mxu0 0.0
        %1087 = vmatpush1.msra.mxu0 0.0
        %1088 = vmatprep.subr.mxu0 0.0
        %1089 = vmatpush1.msra.mxu0 0.0
        %1090 = vmatprep.subr.mxu0 0.0
        %1091 = vmatpush1.msra.mxu0 0.0
        %1092 = vmatprep.subr.mxu0 0.0
        %1093 = vmatpush1.msra.mxu0 0.0
        %1094 = vmatprep.subr.mxu0 0.0
        %1095 = vmatpush1.msra.mxu0 0.0
        %1096 = vmatprep.subr.mxu0 0.0
        %1097 = vmatpush1.msra.mxu0 0.0
        %1098 = vmatprep.subr.mxu0 0.0
        %1099 = vmatpush1.msra.mxu0 0.0
        %1100 = vmatprep.subr.mxu0 0.0
        %1101 = vmatpush1.msra.mxu0 0.0
        %1102 = vmatprep.subr.mxu0 0.0
        %1103 = vmatpush1.msra.mxu0 0.0
        %1104 = vmatprep.subr.mxu0 0.0
        %1105 = vmatpush1.msra.mxu0 0.0
        %1106 = vmatprep.subr.mxu0 0.0
        %1107 = vmatpush1.msra.mxu0 0.0
        %1108 = vmatprep.subr.mxu0 0.0
        %1109 = vmatpush1.msra.mxu0 0.0
        %1110 = vmatprep.subr.mxu0 0.0
        %1111 = vmatpush1.msra.mxu0 0.0
        %1112 = vmatprep.subr.mxu0 0.0
        %1113 = vmatpush1.msra.mxu0 0.0
        %1114 = vmatprep.subr.mxu0 0.0
        %1115 = vmatpush1.msra.mxu0 0.0
        %1116 = vmatprep.subr.mxu0 0.0
        %1117 = vmatpush1.msra.mxu0 0.0
        %1118 = vmatprep.mubr.f32.mxu0 0.0
        %1119 = vmatmul.mubr.f32.gmra.mrb[0].mxu0 %v1052
        %v1120 = vpop.f32.mrb[0].mxu0
        %v1121 = vadd.f32 0.0, %v1120
        %v1122 = vpop.f32.mrb[0].mxu0
        %v1123 = vadd.f32 0.0, %v1122
        %1124 = vdwg.mxu0
        %v1125 = vadd.f32 %v1025, %v1121
        %v1126 = vadd.f32 %v1026, %v1123
        %v1127 = vld [vmem:[%s2] sm:$0xff]
        %1129 = vset.pattern.permute.xlu0 0
        %1130 = vperm.xlu0 %1129, %v1127
        %v1131 = vpop.permute.xlu0 %1130
        %v1133 = vadd.f32 %v1125, %v1131
        %v1134 = vadd.f32 %v1126, %v1131
        %vm1135 = vcmp.gt.f32.partialorder %v1133, 0.0
        %vm1136 = vcmp.gt.f32.partialorder %v1134, 0.0
        %v1137 = vmul.f32 %v1133, 0.01
        %v1138 = vmul.f32 %v1134, 0.01
        %v1139 = vsel %vm1135, %v1133, %v1137
        %v1140 = vsel %vm1136, %v1134, %v1138
        %1141 = vrot.lane.b32.xlu0 %v1139, 17
        %v1142 = vpop.permute.xlu0 %1141
        %1143 = vrot.lane.b32.xlu0 %v1140, 17
        %v1144 = vpop.permute.xlu0 %1143
        %v1145 = vsel %vm258, %v1142, %v1144
        %v1146 = vsel %vm258, %v1144, %v1142
        %v1147 = vmul.f32 %v1146, %v266
        %v1148 = vmul.f32 %v1145, %v270
        %v1149 = vld [vmem:[%s3] sm:$0xff]
        %1150 = vrot.lane.b32.xlu0 %v1139, 16
        %v1151 = vpop.permute.xlu0 %1150
        %1152 = vrot.lane.b32.xlu0 %v1140, 16
        %v1153 = vpop.permute.xlu0 %1152
        %v1154 = vsel %vm280, %v1151, %v1153
        %v1155 = vsel %vm280, %v1153, %v1151
        %v1156 = vmul.f32 %v1155, %v289
        %v1157 = vmul.f32 %v1154, %v293
        %s1158 = scalar_lea.vmem %s3, 8
        %v1159 = vld [vmem:[%s1158] sm:$0xff]
        %v1161 = vsel %vm300, %v1159, 0
        %1163 = vmatprep.subr.mxu0 %v1157
        %1164 = vmatpush1.msra.mxu0 %v1156
        %1165 = vmatprep.subr.mxu0 0.0
        %1166 = vmatpush1.msra.mxu0 0.0
        %1167 = vmatprep.subr.mxu0 0.0
        %1168 = vmatpush1.msra.mxu0 0.0
        %1169 = vmatprep.subr.mxu0 0.0
        %1170 = vmatpush1.msra.mxu0 0.0
        %1171 = vmatprep.subr.mxu0 0.0
        %1172 = vmatpush1.msra.mxu0 0.0
        %1173 = vmatprep.subr.mxu0 0.0
        %1174 = vmatpush1.msra.mxu0 0.0
        %1175 = vmatprep.subr.mxu0 0.0
        %1176 = vmatpush1.msra.mxu0 0.0
        %1177 = vmatprep.subr.mxu0 0.0
        %1178 = vmatpush1.msra.mxu0 0.0
        %1179 = vmatprep.subr.mxu0 0.0
        %1180 = vmatpush1.msra.mxu0 0.0
        %1181 = vmatprep.subr.mxu0 0.0
        %1182 = vmatpush1.msra.mxu0 0.0
        %1183 = vmatprep.subr.mxu0 0.0
        %1184 = vmatpush1.msra.mxu0 0.0
        %1185 = vmatprep.subr.mxu0 0.0
        %1186 = vmatpush1.msra.mxu0 0.0
        %1187 = vmatprep.subr.mxu0 0.0
        %1188 = vmatpush1.msra.mxu0 0.0
        %1189 = vmatprep.subr.mxu0 0.0
        %1190 = vmatpush1.msra.mxu0 0.0
        %1191 = vmatprep.subr.mxu0 0.0
        %1192 = vmatpush1.msra.mxu0 0.0
        %1193 = vmatprep.subr.mxu0 0.0
        %1194 = vmatpush1.msra.mxu0 0.0
        %1195 = vmatprep.subr.mxu0 0.0
        %1196 = vmatpush1.msra.mxu0 0.0
        %1197 = vmatprep.subr.mxu0 0.0
        %1198 = vmatpush1.msra.mxu0 0.0
        %1199 = vmatprep.subr.mxu0 0.0
        %1200 = vmatpush1.msra.mxu0 0.0
        %1201 = vmatprep.subr.mxu0 0.0
        %1202 = vmatpush1.msra.mxu0 0.0
        %1203 = vmatprep.subr.mxu0 0.0
        %1204 = vmatpush1.msra.mxu0 0.0
        %1205 = vmatprep.subr.mxu0 0.0
        %1206 = vmatpush1.msra.mxu0 0.0
        %1207 = vmatprep.subr.mxu0 0.0
        %1208 = vmatpush1.msra.mxu0 0.0
        %1209 = vmatprep.subr.mxu0 0.0
        %1210 = vmatpush1.msra.mxu0 0.0
        %1211 = vmatprep.subr.mxu0 0.0
        %1212 = vmatpush1.msra.mxu0 0.0
        %1213 = vmatprep.subr.mxu0 0.0
        %1214 = vmatpush1.msra.mxu0 0.0
        %1215 = vmatprep.subr.mxu0 0.0
        %1216 = vmatpush1.msra.mxu0 0.0
        %1217 = vmatprep.subr.mxu0 0.0
        %1218 = vmatpush1.msra.mxu0 0.0
        %1219 = vmatprep.subr.mxu0 0.0
        %1220 = vmatpush1.msra.mxu0 0.0
        %1221 = vmatprep.subr.mxu0 0.0
        %1222 = vmatpush1.msra.mxu0 0.0
        %1223 = vmatprep.subr.mxu0 0.0
        %1224 = vmatpush1.msra.mxu0 0.0
        %1225 = vmatprep.subr.mxu0 0.0
        %1226 = vmatpush1.msra.mxu0 0.0
        %1227 = vmatprep.mubr.f32.mxu0 0.0
        %1228 = vmatmul.mubr.f32.gmra.mrb[0].mxu0 %v1161
        %v1229 = vpop.f32.mrb[0].mxu0
        %v1230 = vadd.f32 0.0, %v1229
        %v1231 = vpop.f32.mrb[0].mxu0
        %v1232 = vadd.f32 0.0, %v1231
        %1233 = vdwg.mxu0
        %v1235 = vsel %vm300, %v1149, 0
        %1237 = vmatprep.subr.mxu0 %v1148
        %1238 = vmatpush1.msra.mxu0 %v1147
        %1239 = vmatprep.subr.mxu0 0.0
        %1240 = vmatpush1.msra.mxu0 0.0
        %1241 = vmatprep.subr.mxu0 0.0
        %1242 = vmatpush1.msra.mxu0 0.0
        %1243 = vmatprep.subr.mxu0 0.0
        %1244 = vmatpush1.msra.mxu0 0.0
        %1245 = vmatprep.subr.mxu0 0.0
        %1246 = vmatpush1.msra.mxu0 0.0
        %1247 = vmatprep.subr.mxu0 0.0
        %1248 = vmatpush1.msra.mxu0 0.0
        %1249 = vmatprep.subr.mxu0 0.0
        %1250 = vmatpush1.msra.mxu0 0.0
        %1251 = vmatprep.subr.mxu0 0.0
        %1252 = vmatpush1.msra.mxu0 0.0
        %1253 = vmatprep.subr.mxu0 0.0
        %1254 = vmatpush1.msra.mxu0 0.0
        %1255 = vmatprep.subr.mxu0 0.0
        %1256 = vmatpush1.msra.mxu0 0.0
        %1257 = vmatprep.subr.mxu0 0.0
        %1258 = vmatpush1.msra.mxu0 0.0
        %1259 = vmatprep.subr.mxu0 0.0
        %1260 = vmatpush1.msra.mxu0 0.0
        %1261 = vmatprep.subr.mxu0 0.0
        %1262 = vmatpush1.msra.mxu0 0.0
        %1263 = vmatprep.subr.mxu0 0.0
        %1264 = vmatpush1.msra.mxu0 0.0
        %1265 = vmatprep.subr.mxu0 0.0
        %1266 = vmatpush1.msra.mxu0 0.0
        %1267 = vmatprep.subr.mxu0 0.0
        %1268 = vmatpush1.msra.mxu0 0.0
        %1269 = vmatprep.subr.mxu0 0.0
        %1270 = vmatpush1.msra.mxu0 0.0
        %1271 = vmatprep.subr.mxu0 0.0
        %1272 = vmatpush1.msra.mxu0 0.0
        %1273 = vmatprep.subr.mxu0 0.0
        %1274 = vmatpush1.msra.mxu0 0.0
        %1275 = vmatprep.subr.mxu0 0.0
        %1276 = vmatpush1.msra.mxu0 0.0
        %1277 = vmatprep.subr.mxu0 0.0
        %1278 = vmatpush1.msra.mxu0 0.0
        %1279 = vmatprep.subr.mxu0 0.0
        %1280 = vmatpush1.msra.mxu0 0.0
        %1281 = vmatprep.subr.mxu0 0.0
        %1282 = vmatpush1.msra.mxu0 0.0
        %1283 = vmatprep.subr.mxu0 0.0
        %1284 = vmatpush1.msra.mxu0 0.0
        %1285 = vmatprep.subr.mxu0 0.0
        %1286 = vmatpush1.msra.mxu0 0.0
        %1287 = vmatprep.subr.mxu0 0.0
        %1288 = vmatpush1.msra.mxu0 0.0
        %1289 = vmatprep.subr.mxu0 0.0
        %1290 = vmatpush1.msra.mxu0 0.0
        %1291 = vmatprep.subr.mxu0 0.0
        %1292 = vmatpush1.msra.mxu0 0.0
        %1293 = vmatprep.subr.mxu0 0.0
        %1294 = vmatpush1.msra.mxu0 0.0
        %1295 = vmatprep.subr.mxu0 0.0
        %1296 = vmatpush1.msra.mxu0 0.0
        %1297 = vmatprep.subr.mxu0 0.0
        %1298 = vmatpush1.msra.mxu0 0.0
        %1299 = vmatprep.subr.mxu0 0.0
        %1300 = vmatpush1.msra.mxu0 0.0
        %1301 = vmatprep.mubr.f32.mxu0 0.0
        %1302 = vmatmul.mubr.f32.gmra.mrb[0].mxu0 %v1235
        %v1303 = vpop.f32.mrb[0].mxu0
        %v1304 = vadd.f32 %v1230, %v1303
        %v1305 = vpop.f32.mrb[0].mxu0
        %v1306 = vadd.f32 %v1232, %v1305
        %1307 = vdwg.mxu0
        %1308 = vrot.lane.b32.xlu0 %v1139, 15
        %v1309 = vpop.permute.xlu0 %1308
        %1310 = vrot.lane.b32.xlu0 %v1140, 15
        %v1311 = vpop.permute.xlu0 %1310
        %v1312 = vsel %vm453, %v1309, %v1311
        %v1313 = vsel %vm453, %v1311, %v1309
        %v1314 = vmul.f32 %v1313, %v462
        %v1315 = vmul.f32 %v1312, %v466
        %s1316 = scalar_lea.vmem %s3, 16
        %v1317 = vld [vmem:[%s1316] sm:$0xff]
        %v1319 = vsel %vm300, %v1317, 0
        %1321 = vmatprep.subr.mxu0 %v1315
        %1322 = vmatpush1.msra.mxu0 %v1314
        %1323 = vmatprep.subr.mxu0 0.0
        %1324 = vmatpush1.msra.mxu0 0.0
        %1325 = vmatprep.subr.mxu0 0.0
        %1326 = vmatpush1.msra.mxu0 0.0
        %1327 = vmatprep.subr.mxu0 0.0
        %1328 = vmatpush1.msra.mxu0 0.0
        %1329 = vmatprep.subr.mxu0 0.0
        %1330 = vmatpush1.msra.mxu0 0.0
        %1331 = vmatprep.subr.mxu0 0.0
        %1332 = vmatpush1.msra.mxu0 0.0
        %1333 = vmatprep.subr.mxu0 0.0
        %1334 = vmatpush1.msra.mxu0 0.0
        %1335 = vmatprep.subr.mxu0 0.0
        %1336 = vmatpush1.msra.mxu0 0.0
        %1337 = vmatprep.subr.mxu0 0.0
        %1338 = vmatpush1.msra.mxu0 0.0
        %1339 = vmatprep.subr.mxu0 0.0
        %1340 = vmatpush1.msra.mxu0 0.0
        %1341 = vmatprep.subr.mxu0 0.0
        %1342 = vmatpush1.msra.mxu0 0.0
        %1343 = vmatprep.subr.mxu0 0.0
        %1344 = vmatpush1.msra.mxu0 0.0
        %1345 = vmatprep.subr.mxu0 0.0
        %1346 = vmatpush1.msra.mxu0 0.0
        %1347 = vmatprep.subr.mxu0 0.0
        %1348 = vmatpush1.msra.mxu0 0.0
        %1349 = vmatprep.subr.mxu0 0.0
        %1350 = vmatpush1.msra.mxu0 0.0
        %1351 = vmatprep.subr.mxu0 0.0
        %1352 = vmatpush1.msra.mxu0 0.0
        %1353 = vmatprep.subr.mxu0 0.0
        %1354 = vmatpush1.msra.mxu0 0.0
        %1355 = vmatprep.subr.mxu0 0.0
        %1356 = vmatpush1.msra.mxu0 0.0
        %1357 = vmatprep.subr.mxu0 0.0
        %1358 = vmatpush1.msra.mxu0 0.0
        %1359 = vmatprep.subr.mxu0 0.0
        %1360 = vmatpush1.msra.mxu0 0.0
        %1361 = vmatprep.subr.mxu0 0.0
        %1362 = vmatpush1.msra.mxu0 0.0
        %1363 = vmatprep.subr.mxu0 0.0
        %1364 = vmatpush1.msra.mxu0 0.0
        %1365 = vmatprep.subr.mxu0 0.0
        %1366 = vmatpush1.msra.mxu0 0.0
        %1367 = vmatprep.subr.mxu0 0.0
        %1368 = vmatpush1.msra.mxu0 0.0
        %1369 = vmatprep.subr.mxu0 0.0
        %1370 = vmatpush1.msra.mxu0 0.0
        %1371 = vmatprep.subr.mxu0 0.0
        %1372 = vmatpush1.msra.mxu0 0.0
        %1373 = vmatprep.subr.mxu0 0.0
        %1374 = vmatpush1.msra.mxu0 0.0
        %1375 = vmatprep.subr.mxu0 0.0
        %1376 = vmatpush1.msra.mxu0 0.0
        %1377 = vmatprep.subr.mxu0 0.0
        %1378 = vmatpush1.msra.mxu0 0.0
        %1379 = vmatprep.subr.mxu0 0.0
        %1380 = vmatpush1.msra.mxu0 0.0
        %1381 = vmatprep.subr.mxu0 0.0
        %1382 = vmatpush1.msra.mxu0 0.0
        %1383 = vmatprep.subr.mxu0 0.0
        %1384 = vmatpush1.msra.mxu0 0.0
        %1385 = vmatprep.mubr.f32.mxu0 0.0
        %1386 = vmatmul.mubr.f32.gmra.mrb[0].mxu0 %v1319
        %v1387 = vpop.f32.mrb[0].mxu0
        %v1388 = vadd.f32 0.0, %v1387
        %v1389 = vpop.f32.mrb[0].mxu0
        %v1390 = vadd.f32 0.0, %v1389
        %1391 = vdwg.mxu0
        %v1392 = vadd.f32 %v1304, %v1388
        %v1393 = vadd.f32 %v1306, %v1390
        %1394 = vrot.lane.b32.xlu0 %v1139, 1
        %v1395 = vpop.permute.xlu0 %1394
        %1396 = vrot.lane.b32.xlu0 %v1140, 1
        %v1397 = vpop.permute.xlu0 %1396
        %v1398 = vsel %vm553, %v1395, %v1397
        %v1399 = vsel %vm553, %v1397, %v1395
        %v1400 = vmul.f32 %v1399, %v562
        %v1401 = vmul.f32 %v1398, %v566
        %s1402 = scalar_lea.vmem %s3, 24
        %v1403 = vld [vmem:[%s1402] sm:$0xff]
        %v1405 = vsel %vm300, %v1403, 0
        %1407 = vmatprep.subr.mxu0 %v1401
        %1408 = vmatpush1.msra.mxu0 %v1400
        %1409 = vmatprep.subr.mxu0 0.0
        %1410 = vmatpush1.msra.mxu0 0.0
        %1411 = vmatprep.subr.mxu0 0.0
        %1412 = vmatpush1.msra.mxu0 0.0
        %1413 = vmatprep.subr.mxu0 0.0
        %1414 = vmatpush1.msra.mxu0 0.0
        %1415 = vmatprep.subr.mxu0 0.0
        %1416 = vmatpush1.msra.mxu0 0.0
        %1417 = vmatprep.subr.mxu0 0.0
        %1418 = vmatpush1.msra.mxu0 0.0
        %1419 = vmatprep.subr.mxu0 0.0
        %1420 = vmatpush1.msra.mxu0 0.0
        %1421 = vmatprep.subr.mxu0 0.0
        %1422 = vmatpush1.msra.mxu0 0.0
        %1423 = vmatprep.subr.mxu0 0.0
        %1424 = vmatpush1.msra.mxu0 0.0
        %1425 = vmatprep.subr.mxu0 0.0
        %1426 = vmatpush1.msra.mxu0 0.0
        %1427 = vmatprep.subr.mxu0 0.0
        %1428 = vmatpush1.msra.mxu0 0.0
        %1429 = vmatprep.subr.mxu0 0.0
        %1430 = vmatpush1.msra.mxu0 0.0
        %1431 = vmatprep.subr.mxu0 0.0
        %1432 = vmatpush1.msra.mxu0 0.0
        %1433 = vmatprep.subr.mxu0 0.0
        %1434 = vmatpush1.msra.mxu0 0.0
        %1435 = vmatprep.subr.mxu0 0.0
        %1436 = vmatpush1.msra.mxu0 0.0
        %1437 = vmatprep.subr.mxu0 0.0
        %1438 = vmatpush1.msra.mxu0 0.0
        %1439 = vmatprep.subr.mxu0 0.0
        %1440 = vmatpush1.msra.mxu0 0.0
        %1441 = vmatprep.subr.mxu0 0.0
        %1442 = vmatpush1.msra.mxu0 0.0
        %1443 = vmatprep.subr.mxu0 0.0
        %1444 = vmatpush1.msra.mxu0 0.0
        %1445 = vmatprep.subr.mxu0 0.0
        %1446 = vmatpush1.msra.mxu0 0.0
        %1447 = vmatprep.subr.mxu0 0.0
        %1448 = vmatpush1.msra.mxu0 0.0
        %1449 = vmatprep.subr.mxu0 0.0
        %1450 = vmatpush1.msra.mxu0 0.0
        %1451 = vmatprep.subr.mxu0 0.0
        %1452 = vmatpush1.msra.mxu0 0.0
        %1453 = vmatprep.subr.mxu0 0.0
        %1454 = vmatpush1.msra.mxu0 0.0
        %1455 = vmatprep.subr.mxu0 0.0
        %1456 = vmatpush1.msra.mxu0 0.0
        %1457 = vmatprep.subr.mxu0 0.0
        %1458 = vmatpush1.msra.mxu0 0.0
        %1459 = vmatprep.subr.mxu0 0.0
        %1460 = vmatpush1.msra.mxu0 0.0
        %1461 = vmatprep.subr.mxu0 0.0
        %1462 = vmatpush1.msra.mxu0 0.0
        %1463 = vmatprep.subr.mxu0 0.0
        %1464 = vmatpush1.msra.mxu0 0.0
        %1465 = vmatprep.subr.mxu0 0.0
        %1466 = vmatpush1.msra.mxu0 0.0
        %1467 = vmatprep.subr.mxu0 0.0
        %1468 = vmatpush1.msra.mxu0 0.0
        %1469 = vmatprep.subr.mxu0 0.0
        %1470 = vmatpush1.msra.mxu0 0.0
        %1471 = vmatprep.mubr.f32.mxu0 0.0
        %1472 = vmatmul.mubr.f32.gmra.mrb[0].mxu0 %v1405
        %v1473 = vpop.f32.mrb[0].mxu0
        %v1474 = vadd.f32 0.0, %v1473
        %v1475 = vpop.f32.mrb[0].mxu0
        %v1476 = vadd.f32 0.0, %v1475
        %1477 = vdwg.mxu0
        %v1478 = vadd.f32 %v1392, %v1474
        %v1479 = vadd.f32 %v1393, %v1476
        %s1480 = scalar_lea.vmem %s3, 32
        %v1481 = vld [vmem:[%s1480] sm:$0xff]
        %v1483 = vsel %vm300, %v1481, 0
        %1485 = vmatprep.subr.mxu0 %v1140
        %1486 = vmatpush1.msra.mxu0 %v1139
        %1487 = vmatprep.subr.mxu0 0.0
        %1488 = vmatpush1.msra.mxu0 0.0
        %1489 = vmatprep.subr.mxu0 0.0
        %1490 = vmatpush1.msra.mxu0 0.0
        %1491 = vmatprep.subr.mxu0 0.0
        %1492 = vmatpush1.msra.mxu0 0.0
        %1493 = vmatprep.subr.mxu0 0.0
        %1494 = vmatpush1.msra.mxu0 0.0
        %1495 = vmatprep.subr.mxu0 0.0
        %1496 = vmatpush1.msra.mxu0 0.0
        %1497 = vmatprep.subr.mxu0 0.0
        %1498 = vmatpush1.msra.mxu0 0.0
        %1499 = vmatprep.subr.mxu0 0.0
        %1500 = vmatpush1.msra.mxu0 0.0
        %1501 = vmatprep.subr.mxu0 0.0
        %1502 = vmatpush1.msra.mxu0 0.0
        %1503 = vmatprep.subr.mxu0 0.0
        %1504 = vmatpush1.msra.mxu0 0.0
        %1505 = vmatprep.subr.mxu0 0.0
        %1506 = vmatpush1.msra.mxu0 0.0
        %1507 = vmatprep.subr.mxu0 0.0
        %1508 = vmatpush1.msra.mxu0 0.0
        %1509 = vmatprep.subr.mxu0 0.0
        %1510 = vmatpush1.msra.mxu0 0.0
        %1511 = vmatprep.subr.mxu0 0.0
        %1512 = vmatpush1.msra.mxu0 0.0
        %1513 = vmatprep.subr.mxu0 0.0
        %1514 = vmatpush1.msra.mxu0 0.0
        %1515 = vmatprep.subr.mxu0 0.0
        %1516 = vmatpush1.msra.mxu0 0.0
        %1517 = vmatprep.subr.mxu0 0.0
        %1518 = vmatpush1.msra.mxu0 0.0
        %1519 = vmatprep.subr.mxu0 0.0
        %1520 = vmatpush1.msra.mxu0 0.0
        %1521 = vmatprep.subr.mxu0 0.0
        %1522 = vmatpush1.msra.mxu0 0.0
        %1523 = vmatprep.subr.mxu0 0.0
        %1524 = vmatpush1.msra.mxu0 0.0
        %1525 = vmatprep.subr.mxu0 0.0
        %1526 = vmatpush1.msra.mxu0 0.0
        %1527 = vmatprep.subr.mxu0 0.0
        %1528 = vmatpush1.msra.mxu0 0.0
        %1529 = vmatprep.subr.mxu0 0.0
        %1530 = vmatpush1.msra.mxu0 0.0
        %1531 = vmatprep.subr.mxu0 0.0
        %1532 = vmatpush1.msra.mxu0 0.0
        %1533 = vmatprep.subr.mxu0 0.0
        %1534 = vmatpush1.msra.mxu0 0.0
        %1535 = vmatprep.subr.mxu0 0.0
        %1536 = vmatpush1.msra.mxu0 0.0
        %1537 = vmatprep.subr.mxu0 0.0
        %1538 = vmatpush1.msra.mxu0 0.0
        %1539 = vmatprep.subr.mxu0 0.0
        %1540 = vmatpush1.msra.mxu0 0.0
        %1541 = vmatprep.subr.mxu0 0.0
        %1542 = vmatpush1.msra.mxu0 0.0
        %1543 = vmatprep.subr.mxu0 0.0
        %1544 = vmatpush1.msra.mxu0 0.0
        %1545 = vmatprep.subr.mxu0 0.0
        %1546 = vmatpush1.msra.mxu0 0.0
        %1547 = vmatprep.subr.mxu0 0.0
        %1548 = vmatpush1.msra.mxu0 0.0
        %1549 = vmatprep.mubr.f32.mxu0 0.0
        %1550 = vmatmul.mubr.f32.gmra.mrb[0].mxu0 %v1483
        %v1551 = vpop.f32.mrb[0].mxu0
        %v1552 = vadd.f32 0.0, %v1551
        %v1553 = vpop.f32.mrb[0].mxu0
        %v1554 = vadd.f32 0.0, %v1553
        %1555 = vdwg.mxu0
        %v1556 = vadd.f32 %v1478, %v1552
        %v1557 = vadd.f32 %v1479, %v1554
        %1558 = vrot.lane.b32.xlu0 %v1139, 127
        %v1559 = vpop.permute.xlu0 %1558
        %1560 = vrot.lane.b32.xlu0 %v1140, 127
        %v1561 = vpop.permute.xlu0 %1560
        %v1562 = vsel %vm731, %v1559, %v1561
        %v1563 = vsel %vm731, %v1561, %v1559
        %v1564 = vmul.f32 %v1562, %v740
        %v1565 = vmul.f32 %v1563, %v744
        %s1566 = scalar_lea.vmem %s3, 40
        %v1567 = vld [vmem:[%s1566] sm:$0xff]
        %v1569 = vsel %vm300, %v1567, 0
        %1571 = vmatprep.subr.mxu0 %v1565
        %1572 = vmatpush1.msra.mxu0 %v1564
        %1573 = vmatprep.subr.mxu0 0.0
        %1574 = vmatpush1.msra.mxu0 0.0
        %1575 = vmatprep.subr.mxu0 0.0
        %1576 = vmatpush1.msra.mxu0 0.0
        %1577 = vmatprep.subr.mxu0 0.0
        %1578 = vmatpush1.msra.mxu0 0.0
        %1579 = vmatprep.subr.mxu0 0.0
        %1580 = vmatpush1.msra.mxu0 0.0
        %1581 = vmatprep.subr.mxu0 0.0
        %1582 = vmatpush1.msra.mxu0 0.0
        %1583 = vmatprep.subr.mxu0 0.0
        %1584 = vmatpush1.msra.mxu0 0.0
        %1585 = vmatprep.subr.mxu0 0.0
        %1586 = vmatpush1.msra.mxu0 0.0
        %1587 = vmatprep.subr.mxu0 0.0
        %1588 = vmatpush1.msra.mxu0 0.0
        %1589 = vmatprep.subr.mxu0 0.0
        %1590 = vmatpush1.msra.mxu0 0.0
        %1591 = vmatprep.subr.mxu0 0.0
        %1592 = vmatpush1.msra.mxu0 0.0
        %1593 = vmatprep.subr.mxu0 0.0
        %1594 = vmatpush1.msra.mxu0 0.0
        %1595 = vmatprep.subr.mxu0 0.0
        %1596 = vmatpush1.msra.mxu0 0.0
        %1597 = vmatprep.subr.mxu0 0.0
        %1598 = vmatpush1.msra.mxu0 0.0
        %1599 = vmatprep.subr.mxu0 0.0
        %1600 = vmatpush1.msra.mxu0 0.0
        %1601 = vmatprep.subr.mxu0 0.0
        %1602 = vmatpush1.msra.mxu0 0.0
        %1603 = vmatprep.subr.mxu0 0.0
        %1604 = vmatpush1.msra.mxu0 0.0
        %1605 = vmatprep.subr.mxu0 0.0
        %1606 = vmatpush1.msra.mxu0 0.0
        %1607 = vmatprep.subr.mxu0 0.0
        %1608 = vmatpush1.msra.mxu0 0.0
        %1609 = vmatprep.subr.mxu0 0.0
        %1610 = vmatpush1.msra.mxu0 0.0
        %1611 = vmatprep.subr.mxu0 0.0
        %1612 = vmatpush1.msra.mxu0 0.0
        %1613 = vmatprep.subr.mxu0 0.0
        %1614 = vmatpush1.msra.mxu0 0.0
        %1615 = vmatprep.subr.mxu0 0.0
        %1616 = vmatpush1.msra.mxu0 0.0
        %1617 = vmatprep.subr.mxu0 0.0
        %1618 = vmatpush1.msra.mxu0 0.0
        %1619 = vmatprep.subr.mxu0 0.0
        %1620 = vmatpush1.msra.mxu0 0.0
        %1621 = vmatprep.subr.mxu0 0.0
        %1622 = vmatpush1.msra.mxu0 0.0
        %1623 = vmatprep.subr.mxu0 0.0
        %1624 = vmatpush1.msra.mxu0 0.0
        %1625 = vmatprep.subr.mxu0 0.0
        %1626 = vmatpush1.msra.mxu0 0.0
        %1627 = vmatprep.subr.mxu0 0.0
        %1628 = vmatpush1.msra.mxu0 0.0
        %1629 = vmatprep.subr.mxu0 0.0
        %1630 = vmatpush1.msra.mxu0 0.0
        %1631 = vmatprep.subr.mxu0 0.0
        %1632 = vmatpush1.msra.mxu0 0.0
        %1633 = vmatprep.subr.mxu0 0.0
        %1634 = vmatpush1.msra.mxu0 0.0
        %1635 = vmatprep.mubr.f32.mxu0 0.0
        %1636 = vmatmul.mubr.f32.gmra.mrb[0].mxu0 %v1569
        %v1637 = vpop.f32.mrb[0].mxu0
        %v1638 = vadd.f32 0.0, %v1637
        %v1639 = vpop.f32.mrb[0].mxu0
        %v1640 = vadd.f32 0.0, %v1639
        %1641 = vdwg.mxu0
        %v1642 = vadd.f32 %v1556, %v1638
        %v1643 = vadd.f32 %v1557, %v1640
        %1644 = vrot.lane.b32.xlu0 %v1139, 113
        %v1645 = vpop.permute.xlu0 %1644
        %1646 = vrot.lane.b32.xlu0 %v1140, 113
        %v1647 = vpop.permute.xlu0 %1646
        %v1648 = vsel %vm831, %v1645, %v1647
        %v1649 = vsel %vm831, %v1647, %v1645
        %v1650 = vmul.f32 %v1648, %v840
        %v1651 = vmul.f32 %v1649, %v844
        %s1652 = scalar_lea.vmem %s3, 48
        %v1653 = vld [vmem:[%s1652] sm:$0xff]
        %v1655 = vsel %vm300, %v1653, 0
        %1657 = vmatprep.subr.mxu0 %v1651
        %1658 = vmatpush1.msra.mxu0 %v1650
        %1659 = vmatprep.subr.mxu0 0.0
        %1660 = vmatpush1.msra.mxu0 0.0
        %1661 = vmatprep.subr.mxu0 0.0
        %1662 = vmatpush1.msra.mxu0 0.0
        %1663 = vmatprep.subr.mxu0 0.0
        %1664 = vmatpush1.msra.mxu0 0.0
        %1665 = vmatprep.subr.mxu0 0.0
        %1666 = vmatpush1.msra.mxu0 0.0
        %1667 = vmatprep.subr.mxu0 0.0
        %1668 = vmatpush1.msra.mxu0 0.0
        %1669 = vmatprep.subr.mxu0 0.0
        %1670 = vmatpush1.msra.mxu0 0.0
        %1671 = vmatprep.subr.mxu0 0.0
        %1672 = vmatpush1.msra.mxu0 0.0
        %1673 = vmatprep.subr.mxu0 0.0
        %1674 = vmatpush1.msra.mxu0 0.0
        %1675 = vmatprep.subr.mxu0 0.0
        %1676 = vmatpush1.msra.mxu0 0.0
        %1677 = vmatprep.subr.mxu0 0.0
        %1678 = vmatpush1.msra.mxu0 0.0
        %1679 = vmatprep.subr.mxu0 0.0
        %1680 = vmatpush1.msra.mxu0 0.0
        %1681 = vmatprep.subr.mxu0 0.0
        %1682 = vmatpush1.msra.mxu0 0.0
        %1683 = vmatprep.subr.mxu0 0.0
        %1684 = vmatpush1.msra.mxu0 0.0
        %1685 = vmatprep.subr.mxu0 0.0
        %1686 = vmatpush1.msra.mxu0 0.0
        %1687 = vmatprep.subr.mxu0 0.0
        %1688 = vmatpush1.msra.mxu0 0.0
        %1689 = vmatprep.subr.mxu0 0.0
        %1690 = vmatpush1.msra.mxu0 0.0
        %1691 = vmatprep.subr.mxu0 0.0
        %1692 = vmatpush1.msra.mxu0 0.0
        %1693 = vmatprep.subr.mxu0 0.0
        %1694 = vmatpush1.msra.mxu0 0.0
        %1695 = vmatprep.subr.mxu0 0.0
        %1696 = vmatpush1.msra.mxu0 0.0
        %1697 = vmatprep.subr.mxu0 0.0
        %1698 = vmatpush1.msra.mxu0 0.0
        %1699 = vmatprep.subr.mxu0 0.0
        %1700 = vmatpush1.msra.mxu0 0.0
        %1701 = vmatprep.subr.mxu0 0.0
        %1702 = vmatpush1.msra.mxu0 0.0
        %1703 = vmatprep.subr.mxu0 0.0
        %1704 = vmatpush1.msra.mxu0 0.0
        %1705 = vmatprep.subr.mxu0 0.0
        %1706 = vmatpush1.msra.mxu0 0.0
        %1707 = vmatprep.subr.mxu0 0.0
        %1708 = vmatpush1.msra.mxu0 0.0
        %1709 = vmatprep.subr.mxu0 0.0
        %1710 = vmatpush1.msra.mxu0 0.0
        %1711 = vmatprep.subr.mxu0 0.0
        %1712 = vmatpush1.msra.mxu0 0.0
        %1713 = vmatprep.subr.mxu0 0.0
        %1714 = vmatpush1.msra.mxu0 0.0
        %1715 = vmatprep.subr.mxu0 0.0
        %1716 = vmatpush1.msra.mxu0 0.0
        %1717 = vmatprep.subr.mxu0 0.0
        %1718 = vmatpush1.msra.mxu0 0.0
        %1719 = vmatprep.subr.mxu0 0.0
        %1720 = vmatpush1.msra.mxu0 0.0
        %1721 = vmatprep.mubr.f32.mxu0 0.0
        %1722 = vmatmul.mubr.f32.gmra.mrb[0].mxu0 %v1655
        %v1723 = vpop.f32.mrb[0].mxu0
        %v1724 = vadd.f32 0.0, %v1723
        %v1725 = vpop.f32.mrb[0].mxu0
        %v1726 = vadd.f32 0.0, %v1725
        %1727 = vdwg.mxu0
        %v1728 = vadd.f32 %v1642, %v1724
        %v1729 = vadd.f32 %v1643, %v1726
        %1730 = vrot.lane.b32.xlu0 %v1139, 112
        %v1731 = vpop.permute.xlu0 %1730
        %1732 = vrot.lane.b32.xlu0 %v1140, 112
        %v1733 = vpop.permute.xlu0 %1732
        %v1734 = vsel %vm931, %v1731, %v1733
        %v1735 = vsel %vm931, %v1733, %v1731
        %v1736 = vmul.f32 %v1734, %v940
        %v1737 = vmul.f32 %v1735, %v944
        %s1738 = scalar_lea.vmem %s3, 56
        %v1739 = vld [vmem:[%s1738] sm:$0xff]
        %v1741 = vsel %vm300, %v1739, 0
        %1743 = vmatprep.subr.mxu0 %v1737
        %1744 = vmatpush1.msra.mxu0 %v1736
        %1745 = vmatprep.subr.mxu0 0.0
        %1746 = vmatpush1.msra.mxu0 0.0
        %1747 = vmatprep.subr.mxu0 0.0
        %1748 = vmatpush1.msra.mxu0 0.0
        %1749 = vmatprep.subr.mxu0 0.0
        %1750 = vmatpush1.msra.mxu0 0.0
        %1751 = vmatprep.subr.mxu0 0.0
        %1752 = vmatpush1.msra.mxu0 0.0
        %1753 = vmatprep.subr.mxu0 0.0
        %1754 = vmatpush1.msra.mxu0 0.0
        %1755 = vmatprep.subr.mxu0 0.0
        %1756 = vmatpush1.msra.mxu0 0.0
        %1757 = vmatprep.subr.mxu0 0.0
        %1758 = vmatpush1.msra.mxu0 0.0
        %1759 = vmatprep.subr.mxu0 0.0
        %1760 = vmatpush1.msra.mxu0 0.0
        %1761 = vmatprep.subr.mxu0 0.0
        %1762 = vmatpush1.msra.mxu0 0.0
        %1763 = vmatprep.subr.mxu0 0.0
        %1764 = vmatpush1.msra.mxu0 0.0
        %1765 = vmatprep.subr.mxu0 0.0
        %1766 = vmatpush1.msra.mxu0 0.0
        %1767 = vmatprep.subr.mxu0 0.0
        %1768 = vmatpush1.msra.mxu0 0.0
        %1769 = vmatprep.subr.mxu0 0.0
        %1770 = vmatpush1.msra.mxu0 0.0
        %1771 = vmatprep.subr.mxu0 0.0
        %1772 = vmatpush1.msra.mxu0 0.0
        %1773 = vmatprep.subr.mxu0 0.0
        %1774 = vmatpush1.msra.mxu0 0.0
        %1775 = vmatprep.subr.mxu0 0.0
        %1776 = vmatpush1.msra.mxu0 0.0
        %1777 = vmatprep.subr.mxu0 0.0
        %1778 = vmatpush1.msra.mxu0 0.0
        %1779 = vmatprep.subr.mxu0 0.0
        %1780 = vmatpush1.msra.mxu0 0.0
        %1781 = vmatprep.subr.mxu0 0.0
        %1782 = vmatpush1.msra.mxu0 0.0
        %1783 = vmatprep.subr.mxu0 0.0
        %1784 = vmatpush1.msra.mxu0 0.0
        %1785 = vmatprep.subr.mxu0 0.0
        %1786 = vmatpush1.msra.mxu0 0.0
        %1787 = vmatprep.subr.mxu0 0.0
        %1788 = vmatpush1.msra.mxu0 0.0
        %1789 = vmatprep.subr.mxu0 0.0
        %1790 = vmatpush1.msra.mxu0 0.0
        %1791 = vmatprep.subr.mxu0 0.0
        %1792 = vmatpush1.msra.mxu0 0.0
        %1793 = vmatprep.subr.mxu0 0.0
        %1794 = vmatpush1.msra.mxu0 0.0
        %1795 = vmatprep.subr.mxu0 0.0
        %1796 = vmatpush1.msra.mxu0 0.0
        %1797 = vmatprep.subr.mxu0 0.0
        %1798 = vmatpush1.msra.mxu0 0.0
        %1799 = vmatprep.subr.mxu0 0.0
        %1800 = vmatpush1.msra.mxu0 0.0
        %1801 = vmatprep.subr.mxu0 0.0
        %1802 = vmatpush1.msra.mxu0 0.0
        %1803 = vmatprep.subr.mxu0 0.0
        %1804 = vmatpush1.msra.mxu0 0.0
        %1805 = vmatprep.subr.mxu0 0.0
        %1806 = vmatpush1.msra.mxu0 0.0
        %1807 = vmatprep.mubr.f32.mxu0 0.0
        %1808 = vmatmul.mubr.f32.gmra.mrb[0].mxu0 %v1741
        %v1809 = vpop.f32.mrb[0].mxu0
        %v1810 = vadd.f32 0.0, %v1809
        %v1811 = vpop.f32.mrb[0].mxu0
        %v1812 = vadd.f32 0.0, %v1811
        %1813 = vdwg.mxu0
        %v1814 = vadd.f32 %v1728, %v1810
        %v1815 = vadd.f32 %v1729, %v1812
        %1816 = vrot.lane.b32.xlu0 %v1139, 111
        %v1817 = vpop.permute.xlu0 %1816
        %1818 = vrot.lane.b32.xlu0 %v1140, 111
        %v1819 = vpop.permute.xlu0 %1818
        %v1820 = vsel %vm1031, %v1817, %v1819
        %v1821 = vsel %vm1031, %v1819, %v1817
        %v1822 = vmul.f32 %v1820, %v1040
        %v1823 = vmul.f32 %v1821, %v1044
        %s1824 = scalar_lea.vmem %s3, 64
        %v1825 = vld [vmem:[%s1824] sm:$0xff]
        %v1827 = vsel %vm300, %v1825, 0
        %1829 = vmatprep.subr.mxu0 %v1823
        %1830 = vmatpush1.msra.mxu0 %v1822
        %1831 = vmatprep.subr.mxu0 0.0
        %1832 = vmatpush1.msra.mxu0 0.0
        %1833 = vmatprep.subr.mxu0 0.0
        %1834 = vmatpush1.msra.mxu0 0.0
        %1835 = vmatprep.subr.mxu0 0.0
        %1836 = vmatpush1.msra.mxu0 0.0
        %1837 = vmatprep.subr.mxu0 0.0
        %1838 = vmatpush1.msra.mxu0 0.0
        %1839 = vmatprep.subr.mxu0 0.0
        %1840 = vmatpush1.msra.mxu0 0.0
        %1841 = vmatprep.subr.mxu0 0.0
        %1842 = vmatpush1.msra.mxu0 0.0
        %1843 = vmatprep.subr.mxu0 0.0
        %1844 = vmatpush1.msra.mxu0 0.0
        %1845 = vmatprep.subr.mxu0 0.0
        %1846 = vmatpush1.msra.mxu0 0.0
        %1847 = vmatprep.subr.mxu0 0.0
        %1848 = vmatpush1.msra.mxu0 0.0
        %1849 = vmatprep.subr.mxu0 0.0
        %1850 = vmatpush1.msra.mxu0 0.0
        %1851 = vmatprep.subr.mxu0 0.0
        %1852 = vmatpush1.msra.mxu0 0.0
        %1853 = vmatprep.subr.mxu0 0.0
        %1854 = vmatpush1.msra.mxu0 0.0
        %1855 = vmatprep.subr.mxu0 0.0
        %1856 = vmatpush1.msra.mxu0 0.0
        %1857 = vmatprep.subr.mxu0 0.0
        %1858 = vmatpush1.msra.mxu0 0.0
        %1859 = vmatprep.subr.mxu0 0.0
        %1860 = vmatpush1.msra.mxu0 0.0
        %1861 = vmatprep.subr.mxu0 0.0
        %1862 = vmatpush1.msra.mxu0 0.0
        %1863 = vmatprep.subr.mxu0 0.0
        %1864 = vmatpush1.msra.mxu0 0.0
        %1865 = vmatprep.subr.mxu0 0.0
        %1866 = vmatpush1.msra.mxu0 0.0
        %1867 = vmatprep.subr.mxu0 0.0
        %1868 = vmatpush1.msra.mxu0 0.0
        %1869 = vmatprep.subr.mxu0 0.0
        %1870 = vmatpush1.msra.mxu0 0.0
        %1871 = vmatprep.subr.mxu0 0.0
        %1872 = vmatpush1.msra.mxu0 0.0
        %1873 = vmatprep.subr.mxu0 0.0
        %1874 = vmatpush1.msra.mxu0 0.0
        %1875 = vmatprep.subr.mxu0 0.0
        %1876 = vmatpush1.msra.mxu0 0.0
        %1877 = vmatprep.subr.mxu0 0.0
        %1878 = vmatpush1.msra.mxu0 0.0
        %1879 = vmatprep.subr.mxu0 0.0
        %1880 = vmatpush1.msra.mxu0 0.0
        %1881 = vmatprep.subr.mxu0 0.0
        %1882 = vmatpush1.msra.mxu0 0.0
        %1883 = vmatprep.subr.mxu0 0.0
        %1884 = vmatpush1.msra.mxu0 0.0
        %1885 = vmatprep.subr.mxu0 0.0
        %1886 = vmatpush1.msra.mxu0 0.0
        %1887 = vmatprep.subr.mxu0 0.0
        %1888 = vmatpush1.msra.mxu0 0.0
        %1889 = vmatprep.subr.mxu0 0.0
        %1890 = vmatpush1.msra.mxu0 0.0
        %1891 = vmatprep.subr.mxu0 0.0
        %1892 = vmatpush1.msra.mxu0 0.0
        %1893 = vmatprep.mubr.f32.mxu0 0.0
        %1894 = vmatmul.mubr.f32.gmra.mrb[0].mxu0 %v1827
        %v1895 = vpop.f32.mrb[0].mxu0
        %v1896 = vadd.f32 0.0, %v1895
        %v1897 = vpop.f32.mrb[0].mxu0
        %v1898 = vadd.f32 0.0, %v1897
        %1899 = vdwg.mxu0
        %v1900 = vadd.f32 %v1814, %v1896
        %v1901 = vadd.f32 %v1815, %v1898
        %v1902 = vld [vmem:[%s4] sm:$0xff]
        %1904 = vset.pattern.permute.xlu0 0
        %1905 = vperm.xlu0 %1904, %v1902
        %v1906 = vpop.permute.xlu0 %1905
        %v1908 = vadd.f32 %v1900, %v1906
        %v1909 = vadd.f32 %v1901, %v1906
        %v1910 = vadd.f32 %v250, %v1908
        %v1911 = vadd.f32 %v251, %v1909
        %1912 = vst [vmem:[%s244] sm:$0xff] %v1910
        %1913 = vst [vmem:[%s244 + $0x8] sm:$0xff] %v1911
        %s1914 = sand.u32 %s159, 1
        %s1915 = scalar_lea.sflag [#allocation3], %s1914
        %s1916 = sand.u32 %s159, 1
        %s1917 = smul.addr %s1916, 16
        %s1918 = scalar_lea.vmem [#allocation2], %s1917
        // Predicated region
        $region45: #{tpu_custom_call.1} parent=43 // pred_check
          %p1919 = pneg %p169
        $region46: #{tpu_custom_call.1} parent=43 // pred_check_branch
          %1921 = sbr.rel (%p1919) target = $region48
        $region47: #{tpu_custom_call.1} parent=43 // pred_region
          %s1923 = ssub.s32 256, 256
          %1924 = vsyncadd %s1915, %s1923
          %s1925 = smul.addr %s20, 2
          %s1926 = smul.addr %s1925, 128
          %s1927 = scalar_lea.hbm %s6, %s1926
          %s1929 = sshll.u32 %s1918, 4
          %s1930 = int_to_ptr.vmem [resolvable:$true] %s1929
          %1932 = dma.vmem_to_hbm [thread:$0]  %s1930, 256, %s1927, %s1915
        $region48: #{tpu_custom_call.1} parent=43 // pred_fallthru
          _
      $region44: #{tpu_custom_call.1} parent=5 // pred_fallthru
        _
      %p1933 = scmp.le.s32.totalorder 2, %s15
      // Predicated region
      $region49: #{tpu_custom_call.1} parent=5 // pred_check
        %p1934 = pneg %p1933
      $region50: #{tpu_custom_call.1} parent=5 // pred_check_branch
        %1936 = sbr.rel (%p1934) target = $region52
      $region51: #{tpu_custom_call.1} parent=5 // pred_region
        %s1937 = ssub.s32 %s15, 2
        // Predicated region
        $region53: #{tpu_custom_call.1} parent=51 // pred_check
          %p1938 = pneg %p175
        $region54: #{tpu_custom_call.1} parent=51 // pred_check_branch
          %1940 = sbr.rel (%p1938) target = $region56
        $region55: #{tpu_custom_call.1} parent=51 // pred_region
          %s1941 = sand.u32 %s160, 1
          %s1942 = scalar_lea.sflag [#allocation3], %s1941
          %s1943 = sand.u32 %s160, 1
          %s1944 = smul.addr %s1943, 16
          %s1945 = scalar_lea.vmem [#allocation2], %s1944
          %1946 = dma.done %s1942, 256
        $region56: #{tpu_custom_call.1} parent=51 // pred_fallthru
          _
      $region52: #{tpu_custom_call.1} parent=5 // pred_fallthru
        _
    $region6: #{tpu_custom_call.1} parent=1 // loop_footer
      %s19 = sadd.s32 1, %s15
    $region7: #{tpu_custom_call.1} parent=1 // loop_footer_branch
      %14 = sbr.rel target = $region3
    $region8: #{tpu_custom_call.1} parent=1 // loop_exit
      _
    %1947 = vsyncpa [#allocation3], 1
    %s1948 = scalar_lea.sflag [#allocation3], 1
    %1949 = vsyncpa %s1948, 1

</llo_original>
